<compile_context>
chip_gen: v6e
topology: v6e:2x2x1
jax: 0.10.0
libtpu: 0.0.40
codegen_flags: <defaults>
</compile_context>

<pallas_src>
import functools

import jax
import jax.numpy as jnp
from jax import lax
from jax.experimental import pallas as pl
from jax.experimental.pallas import tpu as pltpu


def _dwsep_kernel(x_body_ref, x_top_ref, x_bot_ref, w_dw_ref, w_pw_ref,
                  b_eff_ref, o_ref, xwin_ref, *, TH, W, K):
    """One grid step = TH output rows of one batch element (NHWC layout).

    x_body_ref: (1, TH, W, Cin)   rows [i*TH, i*TH+TH)
    x_top_ref : (1, 1, W, Cin)    row  i*TH-1   (clamped; zeroed when i == 0)
    x_bot_ref : (1, 1, W, Cin)    row  i*TH+TH  (clamped; zeroed when i == last)
    w_dw_ref  : (K, K, Cin)       depthwise filter
    w_pw_ref  : (Cin, Cout)       pointwise filter
    b_eff_ref : (1, Cout)         folded bias (b_dw @ w_pw + b_pw)
    o_ref     : (1, TH, W, Cout)
    xwin_ref  : (TH+2, W+2, Cin)  VMEM scratch: zero-padded input window
    """
    i = pl.program_id(1)
    n_row_tiles = pl.num_programs(1)
    cin = w_pw_ref.shape[0]
    cout = w_pw_ref.shape[1]
    dt = xwin_ref.dtype

    # ---- assemble the zero-padded (TH+2, W+2, Cin) window in VMEM ----------
    # left / right zero columns (also covers the four halo corners)
    xwin_ref[:, 0:1, :] = jnp.zeros((TH + 2, 1, cin), dt)
    xwin_ref[:, W + 1:W + 2, :] = jnp.zeros((TH + 2, 1, cin), dt)
    # body rows
    xwin_ref[1:TH + 1, 1:W + 1, :] = x_body_ref[0]
    # halo rows; zero them at the top / bottom image boundary
    xwin_ref[0:1, 1:W + 1, :] = x_top_ref[0]
    xwin_ref[TH + 1:TH + 2, 1:W + 1, :] = x_bot_ref[0]

    @pl.when(i == 0)
    def _zero_top():
        xwin_ref[0:1, 1:W + 1, :] = jnp.zeros((1, W, cin), dt)

    @pl.when(i == n_row_tiles - 1)
    def _zero_bot():
        xwin_ref[TH + 1:TH + 2, 1:W + 1, :] = jnp.zeros((1, W, cin), dt)

    # ---- depthwise KxK (stride 1, "same") on the VPU, f32 accumulation ------
    # Per-tap loads from the VMEM scratch (no whole-tile upcast); weights are
    # per-channel scalars broadcast along the lane (channel) dim.
    acc = jnp.zeros((TH, W, cin), jnp.float32)
    for kh in range(K):
        for kw in range(K):
            win = xwin_ref[kh:kh + TH, kw:kw + W, :].astype(jnp.float32)
            acc = acc + win * w_dw_ref[kh, kw, :].astype(jnp.float32)

    # ---- pointwise 1x1 = one MXU matmul over the channel dim ---------------
    # (TH, W, Cin) -> (TH*W, Cin) collapses leading dims only (lane dim kept),
    # so no cross-tile relayout.  For bf16 activations on v6e/v7x, feed the
    # MXU bf16 operands with f32 accumulation (v5e: keep VPU math in f32).
    acc2d = acc.reshape(TH * W, cin)
    y = jnp.dot(acc2d, w_pw_ref[...].astype(jnp.float32),
                preferred_element_type=jnp.float32)
    y = y + b_eff_ref[...].astype(jnp.float32)          # folded dw+pw bias
    o_ref[0] = y.reshape(TH, W, cout).astype(o_ref.dtype)


def _pick_row_tile(H, W, cin, cout, itemsize, vmem_budget_bytes=8 << 20):
    """Largest divisor of H whose working set fits the VMEM budget.

    Budget is sized conservatively (<= ~8 MB of tile buffers) so that
    double-buffered inputs + outputs + scratch stay well under the 32 MiB
    default scoped VMEM and v7x's 64 MiB physical VMEM.  Also prefers >= 2
    row tiles so the (N, row) grid has enough steps to pipeline / megacore.
    """
    per_row = W * (3 * cin * itemsize + 3 * cout * 4)   # body x2 + window, out x2 + f32 acc
    max_rows = max(1, vmem_budget_bytes // max(per_row, 1))
    cap = max(1, min(int(max_rows), H // 2 if H >= 2 else 1))
    th = 1
    for cand in range(1, H + 1):
        if H % cand == 0 and cand <= cap:
            th = cand
    return th


def depthwise_separable_conv(x_nchw, dw_weight, dw_bias, pw_weight, pw_bias,
                             *, kernel_size=3, stride=1, padding=1):
    """Forward pass of DepthwiseSeparableConv.

    x_nchw   : (N, Cin, H, W)
    dw_weight: (Cin, 1, K, K)   PyTorch depthwise Conv2d weight
    dw_bias  : (Cin,)
    pw_weight: (Cout, Cin, 1, 1)
    pw_bias  : (Cout,)
    returns  : (N, Cout, H, W)
    """
    N, Cin, H, W = x_nchw.shape
    K = kernel_size
    Cout = pw_weight.shape[0]
    # TODO(synk): generalize halo fetch to kernel_size > 3 / padding > 1.
    assert K == 3 and padding == 1 and stride == 1, \
        "kernel implements the module defaults: 3x3 depthwise, stride 1, pad 1"

    # ---- weight prep (tiny) -------------------------------------------------
    w_dw = jnp.transpose(dw_weight.reshape(Cin, K, K), (1, 2, 0))    # (K, K, Cin)
    w_pw = jnp.transpose(pw_weight.reshape(Cout, Cin), (1, 0))       # (Cin, Cout)
    b_eff = (dw_bias.astype(jnp.float32) @ w_pw.astype(jnp.float32)
             + pw_bias.astype(jnp.float32)).reshape(1, Cout)         # folded bias

    # ---- layout: NCHW -> NHWC (channels on the lane dim) --------------------
    x_nhwc = jnp.transpose(x_nchw, (0, 2, 3, 1))

    itemsize = jnp.dtype(x_nchw.dtype).itemsize
    TH = _pick_row_tile(H, W, Cin, Cout, itemsize)
    n_row_tiles = H // TH

    kernel = functools.partial(_dwsep_kernel, TH=TH, W=W, K=K)

    flops = 2 * N * H * W * Cin * (K * K + Cout)
    bytes_accessed = int((x_nhwc.size + N * H * W * Cout) * itemsize
                         + (w_dw.size + w_pw.size) * itemsize + b_eff.size * 4)

    out_nhwc = pl.pallas_call(
        kernel,
        out_shape=jax.ShapeDtypeStruct((N, H, W, Cout), x_nchw.dtype),
        grid_spec=pltpu.PrefetchScalarGridSpec(
            num_scalar_prefetch=0,
            grid=(N, n_row_tiles),
            in_specs=[
                # TH body rows of the tile
                pl.BlockSpec((1, TH, W, Cin), lambda n, i: (n, i, 0, 0)),
                # 1-row top halo: row i*TH-1 (clamped; kernel zeroes it at i==0)
                pl.BlockSpec((1, 1, W, Cin),
                             lambda n, i: (n, jnp.maximum(i * TH - 1, 0), 0, 0)),
                # 1-row bottom halo: row (i+1)*TH (clamped; zeroed at i==last)
                pl.BlockSpec((1, 1, W, Cin),
                             lambda n, i: (n, jnp.minimum((i + 1) * TH, H - 1), 0, 0)),
                pl.BlockSpec((K, K, Cin), lambda n, i: (0, 0, 0)),
                pl.BlockSpec((Cin, Cout), lambda n, i: (0, 0)),
                pl.BlockSpec((1, Cout), lambda n, i: (0, 0)),
            ],
            out_specs=pl.BlockSpec((1, TH, W, Cout), lambda n, i: (n, i, 0, 0)),
            scratch_shapes=[pltpu.VMEM((TH + 2, W + 2, Cin), x_nchw.dtype)],
        ),
        compiler_params=pltpu.CompilerParams(
            dimension_semantics=("parallel", "parallel"),
            vmem_limit_bytes=32 * 1024 * 1024,
        ),
        cost_estimate=pl.CostEstimate(
            flops=flops, transcendentals=0, bytes_accessed=bytes_accessed),
    )(x_nhwc, x_nhwc, x_nhwc, w_dw, w_pw, b_eff)

    # ---- layout: NHWC -> NCHW (to match the PyTorch module's output) --------
    return jnp.transpose(out_nhwc, (0, 3, 1, 2))


def _reference(x_nchw, dw_weight, dw_bias, pw_weight, pw_bias, *, padding=1):
    """Pure-JAX reference with lax.conv (matches PyTorch Conv2d semantics)."""
    Cin = x_nchw.shape[1]
    y = lax.conv_general_dilated(
        x_nchw, dw_weight, window_strides=(1, 1),
        padding=((padding, padding), (padding, padding)),
        dimension_numbers=("NCHW", "OIHW", "NCHW"),
        feature_group_count=Cin,
    ) + dw_bias[None, :, None, None]
    z = lax.conv_general_dilated(
        y, pw_weight, window_strides=(1, 1), padding=((0, 0), (0, 0)),
        dimension_numbers=("NCHW", "OIHW", "NCHW"),
    ) + pw_bias[None, :, None, None]
    return z


if __name__ == "__main__":
    N, Cin, H, W = 2, 4, 16, 16
    Cout, K, pad = 8, 3, 1

    key = jax.random.PRNGKey(0)
    kx, k1, k2, k3, k4 = jax.random.split(key, 5)

    x = jax.random.normal(kx, (N, Cin, H, W), jnp.float32)
    dw_w = jax.random.normal(k1, (Cin, 1, K, K), jnp.float32) * 0.1
    dw_b = jax.random.normal(k2, (Cin,), jnp.float32) * 0.1
    pw_w = jax.random.normal(k3, (Cout, Cin, 1, 1), jnp.float32) * 0.1
    pw_b = jax.random.normal(k4, (Cout,), jnp.float32) * 0.1

    out = depthwise_separable_conv(x, dw_w, dw_b, pw_w, pw_b,
                                   kernel_size=K, stride=1, padding=pad)
    out = jax.block_until_ready(out)

    ref = jax.block_until_ready(_reference(x, dw_w, dw_b, pw_w, pw_b, padding=pad))
    assert out.shape == (N, Cout, H, W), out.shape
    max_err = float(jnp.max(jnp.abs(out - ref)))
    assert jnp.allclose(out, ref, atol=1e-4, rtol=1e-4), max_err

    print("KERNEL_OK")
</pallas_src>

<mosaic_0001>
module attributes {stable_mosaic.version = 11 : i64} {
  func.func @_dwsep_kernel(%arg0: i32, %arg1: i32, %arg2: memref<1x8x16x4xf32, #tpu.memory_space<vmem>>, %arg3: memref<1x1x16x4xf32, #tpu.memory_space<vmem>>, %arg4: memref<1x1x16x4xf32, #tpu.memory_space<vmem>>, %arg5: memref<3x3x4xf32, #tpu.memory_space<vmem>>, %arg6: memref<4x8xf32, #tpu.memory_space<vmem>>, %arg7: memref<1x8xf32, #tpu.memory_space<vmem>>, %arg8: memref<1x8x16x8xf32, #tpu.memory_space<vmem>>, %arg9: memref<10x18x4xf32, #tpu.memory_space<vmem>>) attributes {dimension_semantics = [#tpu.dimension_semantics<parallel>, #tpu.dimension_semantics<parallel>], iteration_bounds = array<i64: 2, 2>, scalar_prefetch = 0 : i64, scratch_operands = 1 : i64, tpu.core_type = #tpu.core_type<tc>, window_params = [{transform_indices = @transform_0, window_bounds = array<i64: 1, 8, 16, 4>}, {transform_indices = @transform_1, window_bounds = array<i64: 1, 1, 16, 4>}, {transform_indices = @transform_2, window_bounds = array<i64: 1, 1, 16, 4>}, {pipeline_mode = #tpu.pipeline_mode<synchronous>, transform_indices = @transform_3, window_bounds = array<i64: 3, 3, 4>}, {pipeline_mode = #tpu.pipeline_mode<synchronous>, transform_indices = @transform_4, window_bounds = array<i64: 4, 8>}, {pipeline_mode = #tpu.pipeline_mode<synchronous>, transform_indices = @transform_5, window_bounds = array<i64: 1, 8>}, {transform_indices = @transform_6, window_bounds = array<i64: 1, 8, 16, 8>}]} {
    %cst = arith.constant 0.000000e+00 : f32
    %0 = vector.broadcast %cst : f32 to vector<10x1x4xf32>
    %c0 = arith.constant 0 : index
    %c0_0 = arith.constant 0 : index
    %c0_1 = arith.constant 0 : index
    %1 = vector.load %arg9[%c0, %c0_0, %c0_1] : memref<10x18x4xf32, #tpu.memory_space<vmem>>, vector<10x1x4xf32>
    tpu.vector_store %arg9[%c0, %c0_0, %c0_1], %0 {strides = array<i32>} : memref<10x18x4xf32, #tpu.memory_space<vmem>>, vector<10x1x4xf32>,
    %cst_2 = arith.constant 0.000000e+00 : f32
    %2 = vector.broadcast %cst_2 : f32 to vector<10x1x4xf32>
    %c0_3 = arith.constant 0 : index
    %c17 = arith.constant 17 : index
    %c0_4 = arith.constant 0 : index
    %3 = vector.load %arg9[%c0_3, %c17, %c0_4] : memref<10x18x4xf32, #tpu.memory_space<vmem>>, vector<10x1x4xf32>
    tpu.vector_store %arg9[%c0_3, %c17, %c0_4], %2 {strides = array<i32>} : memref<10x18x4xf32, #tpu.memory_space<vmem>>, vector<10x1x4xf32>,
    %c0_5 = arith.constant 0 : index
    %c0_6 = arith.constant 0 : index
    %c0_7 = arith.constant 0 : index
    %c0_8 = arith.constant 0 : index
    %4 = vector.load %arg2[%c0_5, %c0_6, %c0_7, %c0_8] : memref<1x8x16x4xf32, #tpu.memory_space<vmem>>, vector<1x8x16x4xf32>
    %5 = vector.shape_cast %4 : vector<1x8x16x4xf32> to vector<8x16x4xf32>
    %c1 = arith.constant 1 : index
    %c1_9 = arith.constant 1 : index
    %c0_10 = arith.constant 0 : index
    %6 = vector.load %arg9[%c1, %c1_9, %c0_10] : memref<10x18x4xf32, #tpu.memory_space<vmem>>, vector<8x16x4xf32>
    tpu.vector_store %arg9[%c1, %c1_9, %c0_10], %5 {strides = array<i32>} : memref<10x18x4xf32, #tpu.memory_space<vmem>>, vector<8x16x4xf32>,
    %c0_11 = arith.constant 0 : index
    %c0_12 = arith.constant 0 : index
    %c0_13 = arith.constant 0 : index
    %c0_14 = arith.constant 0 : index
    %7 = vector.load %arg3[%c0_11, %c0_12, %c0_13, %c0_14] : memref<1x1x16x4xf32, #tpu.memory_space<vmem>>, vector<1x1x16x4xf32>
    %8 = vector.shape_cast %7 : vector<1x1x16x4xf32> to vector<1x16x4xf32>
    %c0_15 = arith.constant 0 : index
    %c1_16 = arith.constant 1 : index
    %c0_17 = arith.constant 0 : index
    %9 = vector.load %arg9[%c0_15, %c1_16, %c0_17] : memref<10x18x4xf32, #tpu.memory_space<vmem>>, vector<1x16x4xf32>
    tpu.vector_store %arg9[%c0_15, %c1_16, %c0_17], %8 {strides = array<i32>} : memref<10x18x4xf32, #tpu.memory_space<vmem>>, vector<1x16x4xf32>,
    %c0_18 = arith.constant 0 : index
    %c0_19 = arith.constant 0 : index
    %c0_20 = arith.constant 0 : index
    %c0_21 = arith.constant 0 : index
    %10 = vector.load %arg4[%c0_18, %c0_19, %c0_20, %c0_21] : memref<1x1x16x4xf32, #tpu.memory_space<vmem>>, vector<1x1x16x4xf32>
    %11 = vector.shape_cast %10 : vector<1x1x16x4xf32> to vector<1x16x4xf32>
    %c9 = arith.constant 9 : index
    %c1_22 = arith.constant 1 : index
    %c0_23 = arith.constant 0 : index
    %12 = vector.load %arg9[%c9, %c1_22, %c0_23] : memref<10x18x4xf32, #tpu.memory_space<vmem>>, vector<1x16x4xf32>
    tpu.vector_store %arg9[%c9, %c1_22, %c0_23], %11 {strides = array<i32>} : memref<10x18x4xf32, #tpu.memory_space<vmem>>, vector<1x16x4xf32>,
    %c0_i32 = arith.constant 0 : i32
    %13 = arith.cmpi eq, %arg1, %c0_i32 : i32
    %14 = arith.extui %13 : i1 to i32
    %c0_i32_24 = arith.constant 0 : i32
    %15 = arith.cmpi ne, %14, %c0_i32_24 : i32
    scf.if %15 {
      %cst_89 = arith.constant 0.000000e+00 : f32
      %93 = vector.broadcast %cst_89 : f32 to vector<1x16x4xf32>
      %c0_90 = arith.constant 0 : index
      %c1_91 = arith.constant 1 : index
      %c0_92 = arith.constant 0 : index
      %94 = vector.load %arg9[%c0_90, %c1_91, %c0_92] : memref<10x18x4xf32, #tpu.memory_space<vmem>>, vector<1x16x4xf32>
      tpu.vector_store %arg9[%c0_90, %c1_91, %c0_92], %93 {strides = array<i32>} : memref<10x18x4xf32, #tpu.memory_space<vmem>>, vector<1x16x4xf32>,
    } else {
    }
    %c1_i32 = arith.constant 1 : i32
    %16 = arith.cmpi eq, %arg1, %c1_i32 : i32
    %17 = arith.extui %16 : i1 to i32
    %c0_i32_25 = arith.constant 0 : i32
    %18 = arith.cmpi ne, %17, %c0_i32_25 : i32
    scf.if %18 {
      %cst_89 = arith.constant 0.000000e+00 : f32
      %93 = vector.broadcast %cst_89 : f32 to vector<1x16x4xf32>
      %c9_90 = arith.constant 9 : index
      %c1_91 = arith.constant 1 : index
      %c0_92 = arith.constant 0 : index
      %94 = vector.load %arg9[%c9_90, %c1_91, %c0_92] : memref<10x18x4xf32, #tpu.memory_space<vmem>>, vector<1x16x4xf32>
      tpu.vector_store %arg9[%c9_90, %c1_91, %c0_92], %93 {strides = array<i32>} : memref<10x18x4xf32, #tpu.memory_space<vmem>>, vector<1x16x4xf32>,
    } else {
    }
    %cst_26 = arith.constant 0.000000e+00 : f32
    %19 = vector.broadcast %cst_26 : f32 to vector<8x16x4xf32>
    %c0_27 = arith.constant 0 : index
    %c0_28 = arith.constant 0 : index
    %c0_29 = arith.constant 0 : index
    %20 = vector.load %arg9[%c0_27, %c0_28, %c0_29] : memref<10x18x4xf32, #tpu.memory_space<vmem>>, vector<8x16x4xf32>
    %c0_30 = arith.constant 0 : index
    %c0_31 = arith.constant 0 : index
    %c0_32 = arith.constant 0 : index
    %21 = vector.load %arg5[%c0_30, %c0_31, %c0_32] : memref<3x3x4xf32, #tpu.memory_space<vmem>>, vector<1x1x4xf32>
    %22 = vector.shape_cast %21 : vector<1x1x4xf32> to vector<4xf32>
    %23 = vector.shape_cast %22 : vector<4xf32> to vector<1x1x4xf32>
    %24 = vector.broadcast %23 : vector<1x1x4xf32> to vector<8x16x4xf32>
    %25 = arith.mulf %20, %24 : vector<8x16x4xf32>
    %26 = arith.addf %19, %25 : vector<8x16x4xf32>
    %c0_33 = arith.constant 0 : index
    %c1_34 = arith.constant 1 : index
    %c0_35 = arith.constant 0 : index
    %27 = vector.load %arg9[%c0_33, %c1_34, %c0_35] : memref<10x18x4xf32, #tpu.memory_space<vmem>>, vector<8x16x4xf32>
    %c0_36 = arith.constant 0 : index
    %c1_37 = arith.constant 1 : index
    %c0_38 = arith.constant 0 : index
    %28 = vector.load %arg5[%c0_36, %c1_37, %c0_38] : memref<3x3x4xf32, #tpu.memory_space<vmem>>, vector<1x1x4xf32>
    %29 = vector.shape_cast %28 : vector<1x1x4xf32> to vector<4xf32>
    %30 = vector.shape_cast %29 : vector<4xf32> to vector<1x1x4xf32>
    %31 = vector.broadcast %30 : vector<1x1x4xf32> to vector<8x16x4xf32>
    %32 = arith.mulf %27, %31 : vector<8x16x4xf32>
    %33 = arith.addf %26, %32 : vector<8x16x4xf32>
    %c0_39 = arith.constant 0 : index
    %c2 = arith.constant 2 : index
    %c0_40 = arith.constant 0 : index
    %34 = vector.load %arg9[%c0_39, %c2, %c0_40] : memref<10x18x4xf32, #tpu.memory_space<vmem>>, vector<8x16x4xf32>
    %c0_41 = arith.constant 0 : index
    %c2_42 = arith.constant 2 : index
    %c0_43 = arith.constant 0 : index
    %35 = vector.load %arg5[%c0_41, %c2_42, %c0_43] : memref<3x3x4xf32, #tpu.memory_space<vmem>>, vector<1x1x4xf32>
    %36 = vector.shape_cast %35 : vector<1x1x4xf32> to vector<4xf32>
    %37 = vector.shape_cast %36 : vector<4xf32> to vector<1x1x4xf32>
    %38 = vector.broadcast %37 : vector<1x1x4xf32> to vector<8x16x4xf32>
    %39 = arith.mulf %34, %38 : vector<8x16x4xf32>
    %40 = arith.addf %33, %39 : vector<8x16x4xf32>
    %c1_44 = arith.constant 1 : index
    %c0_45 = arith.constant 0 : index
    %c0_46 = arith.constant 0 : index
    %41 = vector.load %arg9[%c1_44, %c0_45, %c0_46] : memref<10x18x4xf32, #tpu.memory_space<vmem>>, vector<8x16x4xf32>
    %c1_47 = arith.constant 1 : index
    %c0_48 = arith.constant 0 : index
    %c0_49 = arith.constant 0 : index
    %42 = vector.load %arg5[%c1_47, %c0_48, %c0_49] : memref<3x3x4xf32, #tpu.memory_space<vmem>>, vector<1x1x4xf32>
    %43 = vector.shape_cast %42 : vector<1x1x4xf32> to vector<4xf32>
    %44 = vector.shape_cast %43 : vector<4xf32> to vector<1x1x4xf32>
    %45 = vector.broadcast %44 : vector<1x1x4xf32> to vector<8x16x4xf32>
    %46 = arith.mulf %41, %45 : vector<8x16x4xf32>
    %47 = arith.addf %40, %46 : vector<8x16x4xf32>
    %c1_50 = arith.constant 1 : index
    %c1_51 = arith.constant 1 : index
    %c0_52 = arith.constant 0 : index
    %48 = vector.load %arg9[%c1_50, %c1_51, %c0_52] : memref<10x18x4xf32, #tpu.memory_space<vmem>>, vector<8x16x4xf32>
    %c1_53 = arith.constant 1 : index
    %c1_54 = arith.constant 1 : index
    %c0_55 = arith.constant 0 : index
    %49 = vector.load %arg5[%c1_53, %c1_54, %c0_55] : memref<3x3x4xf32, #tpu.memory_space<vmem>>, vector<1x1x4xf32>
    %50 = vector.shape_cast %49 : vector<1x1x4xf32> to vector<4xf32>
    %51 = vector.shape_cast %50 : vector<4xf32> to vector<1x1x4xf32>
    %52 = vector.broadcast %51 : vector<1x1x4xf32> to vector<8x16x4xf32>
    %53 = arith.mulf %48, %52 : vector<8x16x4xf32>
    %54 = arith.addf %47, %53 : vector<8x16x4xf32>
    %c1_56 = arith.constant 1 : index
    %c2_57 = arith.constant 2 : index
    %c0_58 = arith.constant 0 : index
    %55 = vector.load %arg9[%c1_56, %c2_57, %c0_58] : memref<10x18x4xf32, #tpu.memory_space<vmem>>, vector<8x16x4xf32>
    %c1_59 = arith.constant 1 : index
    %c2_60 = arith.constant 2 : index
    %c0_61 = arith.constant 0 : index
    %56 = vector.load %arg5[%c1_59, %c2_60, %c0_61] : memref<3x3x4xf32, #tpu.memory_space<vmem>>, vector<1x1x4xf32>
    %57 = vector.shape_cast %56 : vector<1x1x4xf32> to vector<4xf32>
    %58 = vector.shape_cast %57 : vector<4xf32> to vector<1x1x4xf32>
    %59 = vector.broadcast %58 : vector<1x1x4xf32> to vector<8x16x4xf32>
    %60 = arith.mulf %55, %59 : vector<8x16x4xf32>
    %61 = arith.addf %54, %60 : vector<8x16x4xf32>
    %c2_62 = arith.constant 2 : index
    %c0_63 = arith.constant 0 : index
    %c0_64 = arith.constant 0 : index
    %62 = vector.load %arg9[%c2_62, %c0_63, %c0_64] : memref<10x18x4xf32, #tpu.memory_space<vmem>>, vector<8x16x4xf32>
    %c2_65 = arith.constant 2 : index
    %c0_66 = arith.constant 0 : index
    %c0_67 = arith.constant 0 : index
    %63 = vector.load %arg5[%c2_65, %c0_66, %c0_67] : memref<3x3x4xf32, #tpu.memory_space<vmem>>, vector<1x1x4xf32>
    %64 = vector.shape_cast %63 : vector<1x1x4xf32> to vector<4xf32>
    %65 = vector.shape_cast %64 : vector<4xf32> to vector<1x1x4xf32>
    %66 = vector.broadcast %65 : vector<1x1x4xf32> to vector<8x16x4xf32>
    %67 = arith.mulf %62, %66 : vector<8x16x4xf32>
    %68 = arith.addf %61, %67 : vector<8x16x4xf32>
    %c2_68 = arith.constant 2 : index
    %c1_69 = arith.constant 1 : index
    %c0_70 = arith.constant 0 : index
    %69 = vector.load %arg9[%c2_68, %c1_69, %c0_70] : memref<10x18x4xf32, #tpu.memory_space<vmem>>, vector<8x16x4xf32>
    %c2_71 = arith.constant 2 : index
    %c1_72 = arith.constant 1 : index
    %c0_73 = arith.constant 0 : index
    %70 = vector.load %arg5[%c2_71, %c1_72, %c0_73] : memref<3x3x4xf32, #tpu.memory_space<vmem>>, vector<1x1x4xf32>
    %71 = vector.shape_cast %70 : vector<1x1x4xf32> to vector<4xf32>
    %72 = vector.shape_cast %71 : vector<4xf32> to vector<1x1x4xf32>
    %73 = vector.broadcast %72 : vector<1x1x4xf32> to vector<8x16x4xf32>
    %74 = arith.mulf %69, %73 : vector<8x16x4xf32>
    %75 = arith.addf %68, %74 : vector<8x16x4xf32>
    %c2_74 = arith.constant 2 : index
    %c2_75 = arith.constant 2 : index
    %c0_76 = arith.constant 0 : index
    %76 = vector.load %arg9[%c2_74, %c2_75, %c0_76] : memref<10x18x4xf32, #tpu.memory_space<vmem>>, vector<8x16x4xf32>
    %c2_77 = arith.constant 2 : index
    %c2_78 = arith.constant 2 : index
    %c0_79 = arith.constant 0 : index
    %77 = vector.load %arg5[%c2_77, %c2_78, %c0_79] : memref<3x3x4xf32, #tpu.memory_space<vmem>>, vector<1x1x4xf32>
    %78 = vector.shape_cast %77 : vector<1x1x4xf32> to vector<4xf32>
    %79 = vector.shape_cast %78 : vector<4xf32> to vector<1x1x4xf32>
    %80 = vector.broadcast %79 : vector<1x1x4xf32> to vector<8x16x4xf32>
    %81 = arith.mulf %76, %80 : vector<8x16x4xf32>
    %82 = arith.addf %75, %81 : vector<8x16x4xf32>
    %83 = vector.shape_cast %82 : vector<8x16x4xf32> to vector<128x4xf32>
    %c0_80 = arith.constant 0 : index
    %c0_81 = arith.constant 0 : index
    %84 = vector.load %arg6[%c0_80, %c0_81] : memref<4x8xf32, #tpu.memory_space<vmem>>, vector<4x8xf32>
    %cst_82 = arith.constant dense<0.000000e+00> : vector<128x8xf32>
    %85 = tpu.matmul %83, %84, %cst_82 {dimension_numbers = #tpu.dot_dimension_numbers<[1], [0], [0], [1], [0, 0, 1, 1], [], []>} : vector<128x4xf32>, vector<4x8xf32>, vector<128x8xf32> -> vector<128x8xf32>
    %c0_83 = arith.constant 0 : index
    %c0_84 = arith.constant 0 : index
    %86 = vector.load %arg7[%c0_83, %c0_84] : memref<1x8xf32, #tpu.memory_space<vmem>>, vector<1x8xf32>
    %87 = vector.broadcast %86 : vector<1x8xf32> to vector<128x8xf32>
    %88 = arith.addf %85, %87 : vector<128x8xf32>
    %89 = vector.shape_cast %88 : vector<128x8xf32> to vector<8x16x8xf32>
    %c0_85 = arith.constant 0 : index
    %c0_86 = arith.constant 0 : index
    %c0_87 = arith.constant 0 : index
    %c0_88 = arith.constant 0 : index
    %90 = vector.load %arg8[%c0_85, %c0_86, %c0_87, %c0_88] : memref<1x8x16x8xf32, #tpu.memory_space<vmem>>, vector<1x8x16x8xf32>
    %91 = vector.shape_cast %90 : vector<1x8x16x8xf32> to vector<8x16x8xf32>
    %92 = vector.shape_cast %89 : vector<8x16x8xf32> to vector<1x8x16x8xf32>
    tpu.vector_store %arg8[%c0_85, %c0_86, %c0_87, %c0_88], %92 {strides = array<i32>} : memref<1x8x16x8xf32, #tpu.memory_space<vmem>>, vector<1x8x16x8xf32>,
    return
  }
  func.func @transform_0(%arg0: i32, %arg1: i32) -> (i32, i32, i32, i32) {
    %c0_i32 = arith.constant 0 : i32
    %c0_i32_0 = arith.constant 0 : i32
    %c0_i32_1 = arith.constant 0 : i32
    return %arg0, %arg1, %c0_i32, %c0_i32_0 : i32, i32, i32, i32
  }
  func.func @transform_1(%arg0: i32, %arg1: i32) -> (i32, i32, i32, i32) {
    %c8_i32 = arith.constant 8 : i32
    %0 = arith.muli %arg1, %c8_i32 : i32
    %c1_i32 = arith.constant 1 : i32
    %1 = arith.subi %0, %c1_i32 : i32
    %c0_i32 = arith.constant 0 : i32
    %2 = arith.maxsi %1, %c0_i32 : i32
    %c0_i32_0 = arith.constant 0 : i32
    %c0_i32_1 = arith.constant 0 : i32
    %c0_i32_2 = arith.constant 0 : i32
    return %arg0, %2, %c0_i32_0, %c0_i32_1 : i32, i32, i32, i32
  }
  func.func @transform_2(%arg0: i32, %arg1: i32) -> (i32, i32, i32, i32) {
    %c1_i32 = arith.constant 1 : i32
    %0 = arith.addi %arg1, %c1_i32 : i32
    %c8_i32 = arith.constant 8 : i32
    %1 = arith.muli %0, %c8_i32 : i32
    %c15_i32 = arith.constant 15 : i32
    %2 = arith.minsi %1, %c15_i32 : i32
    %c0_i32 = arith.constant 0 : i32
    %c0_i32_0 = arith.constant 0 : i32
    %c0_i32_1 = arith.constant 0 : i32
    return %arg0, %2, %c0_i32, %c0_i32_0 : i32, i32, i32, i32
  }
  func.func @transform_3(%arg0: i32, %arg1: i32) -> (i32, i32, i32) {
    %c0_i32 = arith.constant 0 : i32
    %c0_i32_0 = arith.constant 0 : i32
    %c0_i32_1 = arith.constant 0 : i32
    %c0_i32_2 = arith.constant 0 : i32
    return %c0_i32, %c0_i32_0, %c0_i32_1 : i32, i32, i32
  }
  func.func @transform_4(%arg0: i32, %arg1: i32) -> (i32, i32) {
    %c0_i32 = arith.constant 0 : i32
    %c0_i32_0 = arith.constant 0 : i32
    %c0_i32_1 = arith.constant 0 : i32
    return %c0_i32, %c0_i32_0 : i32, i32
  }
  func.func @transform_5(%arg0: i32, %arg1: i32) -> (i32, i32) {
    %c0_i32 = arith.constant 0 : i32
    %c0_i32_0 = arith.constant 0 : i32
    %c0_i32_1 = arith.constant 0 : i32
    return %c0_i32, %c0_i32_0 : i32, i32
  }
  func.func @transform_6(%arg0: i32, %arg1: i32) -> (i32, i32, i32, i32) {
    %c0_i32 = arith.constant 0 : i32
    %c0_i32_0 = arith.constant 0 : i32
    %c0_i32_1 = arith.constant 0 : i32
    return %arg0, %arg1, %c0_i32, %c0_i32_0 : i32, i32, i32, i32
  }
}

</mosaic_0001>

<llo_original>
// kernel: tpu_custom_call.1
$region0: #{tpu_custom_call.1}
  #allocation0 [shape = 'u32[]', space=smem, size = 0x4, offset = 0x4, fixed_abs, tag = 'smem constant byte address 0x4 - core index']
  #allocation1 [shape = 'u32[144,128]{1,0:T(1,128)}', space=vmem, size = 0x12000, scoped, tag = 'internal scratch']
  #allocation2 [shape = 'f32[10,18,4]{2,1,0:T(8,128)}', space=vmem, size = 0x1e000, scoped, tag = 'scratch operand']
  %s0 = inlined_call_operand.vmem [shape: f32[2,16,16,4], index: 0, kind: input, shape index: {}]
  %s1 = inlined_call_operand.vmem [shape: f32[2,16,16,4], index: 1, kind: input, shape index: {}]
  %s2 = inlined_call_operand.vmem [shape: f32[2,16,16,4], index: 2, kind: input, shape index: {}]
  %s3 = inlined_call_operand.vmem [shape: f32[3,3,4], index: 3, kind: input, shape index: {}]
  %s4 = inlined_call_operand.vmem [shape: f32[4,8], index: 4, kind: input, shape index: {}]
  %s5 = inlined_call_operand.vmem [shape: f32[1,8], index: 5, kind: input, shape index: {}]
  %s6 = inlined_call_operand.vmem [shape: f32[2,16,16,8], index: 6, kind: output, shape index: {}]
  %s7 = sld [smem:[#allocation0]]
  $region65: #{tpu_custom_call.1} parent=0
    _
  %s9 = ssub.s32 1, %s7
  %s10 = scalar_select 0, %s9, %s7
  loop: start=0, step=1, limit=6
  $region2: #{tpu_custom_call.1} parent=0 // loop_pre_header
    _
  $region3: #{tpu_custom_call.1} parent=0 // loop_header
    %s12 = sphi 0, %s16
    %p13 = scmp.ge.s32.totalorder %s12, 6
    %s19 = sphi 0, %s31
    %s20 = sphi 0, %s27
    %s21 = sphi 0, %s19
    %s22 = sphi 0, %s20
    %s23 = sphi 0, %s21
    %s24 = sphi 0, %s22
    %s36 = sphi 0, %s38
    %s39 = sphi 0, %s36
    %s40 = sphi 0, %s39
    %s56 = sphi 0, %s40
    %s72 = sphi 0, %s74
    %s75 = sphi 0, %s72
    %s76 = sphi 0, %s75
    %s92 = sphi 0, %s76
    %s108 = sphi 0, %s110
    %s111 = sphi 0, %s108
    %s112 = sphi 0, %s111
    %s128 = sphi 0, %s112
    %s132 = sphi 0, %s132
    %s134 = sphi 0, %s132
    %s135 = sphi 0, %s134
    %s149 = sphi 0, %s135
    %s153 = sphi 0, %s153
    %s155 = sphi 0, %s153
    %s156 = sphi 0, %s155
    %s170 = sphi 0, %s156
    %s174 = sphi 0, %s174
    %s176 = sphi 0, %s174
    %s177 = sphi 0, %s176
    %s191 = sphi 0, %s177
    %s199 = sphi 0, %s201
    %s202 = sphi 0, %s199
    %s203 = sphi 0, %s202
    %s219 = sphi 0, %s203
  $region4: #{tpu_custom_call.1} parent=0 // loop_header_branch
    %15 = sbr.rel (%p13) target = $region8
  $region5: #{tpu_custom_call.1} parent=0 // loop_body
    %s17 = ssub.s32 %s12, 1
    %s18 = ssub.s32 %s12, 2
    %s25 = sadd.s32 1, %s20
    %p26 = scmp.ge.s32.totalorder %s25, 2
    %s27 = scalar_select %p26, 0, %s25
    %s28 = sadd.s32 1, %s19
    %s29 = scalar_select %p26, %s28, %s19
    %p30 = scmp.ge.s32.totalorder %s29, 2
    %s31 = scalar_select %p30, 0, %s29
    %s32 = ssub.s32 %s19, %s31
    %s33 = ssub.s32 %s20, %s27
    %s34 = sor.u32 %s32, %s33
    %p35 = scmp.eq.s32.totalorder %s34, 0
    %s37 = sadd.s32 %s36, 1
    %s38 = scalar_select %p35, %s36, %s37
    %p41 = pneg %p35
    %p42 = scmp.eq.s32.totalorder %s12, 3
    %p43 = por %p41, %p42
    %p44 = scmp.ne.s32.totalorder %s36, %s39
    %p45 = scmp.eq.s32.totalorder %s12, 0
    %p46 = por %p44, %p45
    %p47 = scmp.ne.s32.totalorder %s36, %s39
    %p48 = scmp.eq.s32.totalorder %s17, 3
    %p49 = por %p47, %p48
    %p50 = scmp.ne.s32.totalorder %s39, %s40
    %p51 = scmp.eq.s32.totalorder %s17, 0
    %p52 = por %p50, %p51
    %p53 = scmp.ne.s32.totalorder %s39, %s40
    %p54 = scmp.eq.s32.totalorder %s18, 3
    %p55 = por %p53, %p54
    %p57 = scmp.ne.s32.totalorder %s40, %s56
    %p58 = scmp.eq.s32.totalorder %s18, 0
    %p59 = por %p57, %p58
    %s60 = smul.u32 %s20, 8
    %s61 = ssub.s32 %s60, 1
    %p62 = scmp.gt.s32.totalorder %s61, 0
    %s63 = scalar_select %p62, %s61, 0
    %s64 = smul.u32 %s27, 8
    %s65 = ssub.s32 %s64, 1
    %p66 = scmp.gt.s32.totalorder %s65, 0
    %s67 = scalar_select %p66, %s65, 0
    %s68 = ssub.s32 %s19, %s31
    %s69 = ssub.s32 %s63, %s67
    %s70 = sor.u32 %s68, %s69
    %p71 = scmp.eq.s32.totalorder %s70, 0
    %s73 = sadd.s32 %s72, 1
    %s74 = scalar_select %p71, %s72, %s73
    %p77 = pneg %p71
    %p78 = scmp.eq.s32.totalorder %s12, 3
    %p79 = por %p77, %p78
    %p80 = scmp.ne.s32.totalorder %s72, %s75
    %p81 = scmp.eq.s32.totalorder %s12, 0
    %p82 = por %p80, %p81
    %p83 = scmp.ne.s32.totalorder %s72, %s75
    %p84 = scmp.eq.s32.totalorder %s17, 3
    %p85 = por %p83, %p84
    %p86 = scmp.ne.s32.totalorder %s75, %s76
    %p87 = scmp.eq.s32.totalorder %s17, 0
    %p88 = por %p86, %p87
    %p89 = scmp.ne.s32.totalorder %s75, %s76
    %p90 = scmp.eq.s32.totalorder %s18, 3
    %p91 = por %p89, %p90
    %p93 = scmp.ne.s32.totalorder %s76, %s92
    %p94 = scmp.eq.s32.totalorder %s18, 0
    %p95 = por %p93, %p94
    %s96 = sadd.s32 %s20, 1
    %s97 = smul.u32 %s96, 8
    %p98 = scmp.lt.s32.totalorder %s97, 15
    %s99 = scalar_select %p98, %s97, 15
    %s100 = sadd.s32 %s27, 1
    %s101 = smul.u32 %s100, 8
    %p102 = scmp.lt.s32.totalorder %s101, 15
    %s103 = scalar_select %p102, %s101, 15
    %s104 = ssub.s32 %s19, %s31
    %s105 = ssub.s32 %s99, %s103
    %s106 = sor.u32 %s104, %s105
    %p107 = scmp.eq.s32.totalorder %s106, 0
    %s109 = sadd.s32 %s108, 1
    %s110 = scalar_select %p107, %s108, %s109
    %p113 = pneg %p107
    %p114 = scmp.eq.s32.totalorder %s12, 3
    %p115 = por %p113, %p114
    %p116 = scmp.ne.s32.totalorder %s108, %s111
    %p117 = scmp.eq.s32.totalorder %s12, 0
    %p118 = por %p116, %p117
    %p119 = scmp.ne.s32.totalorder %s108, %s111
    %p120 = scmp.eq.s32.totalorder %s17, 3
    %p121 = por %p119, %p120
    %p122 = scmp.ne.s32.totalorder %s111, %s112
    %p123 = scmp.eq.s32.totalorder %s17, 0
    %p124 = por %p122, %p123
    %p125 = scmp.ne.s32.totalorder %s111, %s112
    %p126 = scmp.eq.s32.totalorder %s18, 3
    %p127 = por %p125, %p126
    %p129 = scmp.ne.s32.totalorder %s112, %s128
    %p130 = scmp.eq.s32.totalorder %s18, 0
    %p131 = por %p129, %p130
    %s133 = sadd.s32 %s132, 1
    %p136 = scmp.eq.s32.totalorder %s12, 3
    %p137 = scmp.ne.s32.totalorder %s132, %s134
    %p138 = scmp.eq.s32.totalorder %s12, 0
    %p139 = por %p137, %p138
    %p140 = scmp.ne.s32.totalorder %s132, %s134
    %p141 = scmp.eq.s32.totalorder %s17, 3
    %p142 = por %p140, %p141
    %p143 = scmp.ne.s32.totalorder %s134, %s135
    %p144 = scmp.eq.s32.totalorder %s17, 0
    %p145 = por %p143, %p144
    %p146 = scmp.ne.s32.totalorder %s134, %s135
    %p147 = scmp.eq.s32.totalorder %s18, 3
    %p148 = por %p146, %p147
    %p150 = scmp.ne.s32.totalorder %s135, %s149
    %p151 = scmp.eq.s32.totalorder %s18, 0
    %p152 = por %p150, %p151
    %s154 = sadd.s32 %s153, 1
    %p157 = scmp.eq.s32.totalorder %s12, 3
    %p158 = scmp.ne.s32.totalorder %s153, %s155
    %p159 = scmp.eq.s32.totalorder %s12, 0
    %p160 = por %p158, %p159
    %p161 = scmp.ne.s32.totalorder %s153, %s155
    %p162 = scmp.eq.s32.totalorder %s17, 3
    %p163 = por %p161, %p162
    %p164 = scmp.ne.s32.totalorder %s155, %s156
    %p165 = scmp.eq.s32.totalorder %s17, 0
    %p166 = por %p164, %p165
    %p167 = scmp.ne.s32.totalorder %s155, %s156
    %p168 = scmp.eq.s32.totalorder %s18, 3
    %p169 = por %p167, %p168
    %p171 = scmp.ne.s32.totalorder %s156, %s170
    %p172 = scmp.eq.s32.totalorder %s18, 0
    %p173 = por %p171, %p172
    %s175 = sadd.s32 %s174, 1
    %p178 = scmp.eq.s32.totalorder %s12, 3
    %p179 = scmp.ne.s32.totalorder %s174, %s176
    %p180 = scmp.eq.s32.totalorder %s12, 0
    %p181 = por %p179, %p180
    %p182 = scmp.ne.s32.totalorder %s174, %s176
    %p183 = scmp.eq.s32.totalorder %s17, 3
    %p184 = por %p182, %p183
    %p185 = scmp.ne.s32.totalorder %s176, %s177
    %p186 = scmp.eq.s32.totalorder %s17, 0
    %p187 = por %p185, %p186
    %p188 = scmp.ne.s32.totalorder %s176, %s177
    %p189 = scmp.eq.s32.totalorder %s18, 3
    %p190 = por %p188, %p189
    %p192 = scmp.ne.s32.totalorder %s177, %s191
    %p193 = scmp.eq.s32.totalorder %s18, 0
    %p194 = por %p192, %p193
    %s195 = ssub.s32 %s19, %s31
    %s196 = ssub.s32 %s20, %s27
    %s197 = sor.u32 %s195, %s196
    %p198 = scmp.eq.s32.totalorder %s197, 0
    %s200 = sadd.s32 %s199, 1
    %s201 = scalar_select %p198, %s199, %s200
    %p204 = pneg %p198
    %p205 = scmp.eq.s32.totalorder %s12, 3
    %p206 = por %p204, %p205
    %p207 = scmp.ne.s32.totalorder %s199, %s202
    %p208 = scmp.eq.s32.totalorder %s12, 0
    %p209 = por %p207, %p208
    %p210 = scmp.ne.s32.totalorder %s199, %s202
    %p211 = scmp.eq.s32.totalorder %s17, 3
    %p212 = por %p210, %p211
    %p213 = scmp.ne.s32.totalorder %s202, %s203
    %p214 = scmp.eq.s32.totalorder %s17, 0
    %p215 = por %p213, %p214
    %p216 = scmp.ne.s32.totalorder %s202, %s203
    %p217 = scmp.eq.s32.totalorder %s18, 3
    %p218 = por %p216, %p217
    %p220 = scmp.ne.s32.totalorder %s203, %s219
    %p221 = scmp.eq.s32.totalorder %s18, 0
    %p222 = por %p220, %p221
    %p223 = scmp.le.s32.totalorder 1, %s12
    %p224 = scmp.lt.s32.totalorder %s12, 5
    %p225 = pnand %p223, %p224
    %p226 = pneg %p225
    // Predicated region
    $region9: #{tpu_custom_call.1} parent=5 // pred_check
      _
    $region10: #{tpu_custom_call.1} parent=5 // pred_check_branch
      %228 = sbr.rel (%p225) target = $region12
    $region11: #{tpu_custom_call.1} parent=5 // pred_region
      %s229 = ssub.s32 %s12, 1
      // Predicated region
      $region13: #{tpu_custom_call.1} parent=11 // pred_check
        %p230 = pneg %p145
      $region14: #{tpu_custom_call.1} parent=11 // pred_check_branch
        %232 = sbr.rel (%p230) target = $region16
      $region15: #{tpu_custom_call.1} parent=11 // pred_region
        _
      $region16: #{tpu_custom_call.1} parent=11 // pred_fallthru
        _
      // Predicated region
      $region17: #{tpu_custom_call.1} parent=11 // pred_check
        %p233 = pneg %p166
      $region18: #{tpu_custom_call.1} parent=11 // pred_check_branch
        %235 = sbr.rel (%p233) target = $region20
      $region19: #{tpu_custom_call.1} parent=11 // pred_region
        _
      $region20: #{tpu_custom_call.1} parent=11 // pred_fallthru
        _
      // Predicated region
      $region21: #{tpu_custom_call.1} parent=11 // pred_check
        %p236 = pneg %p187
      $region22: #{tpu_custom_call.1} parent=11 // pred_check_branch
        %238 = sbr.rel (%p236) target = $region24
      $region23: #{tpu_custom_call.1} parent=11 // pred_region
        _
      $region24: #{tpu_custom_call.1} parent=11 // pred_fallthru
        _
    $region12: #{tpu_custom_call.1} parent=5 // pred_fallthru
      _
    %p239 = scmp.lt.s32.totalorder %s12, 4
    // Predicated region
    $region25: #{tpu_custom_call.1} parent=5 // pred_check
      %p240 = pneg %p239
    $region26: #{tpu_custom_call.1} parent=5 // pred_check_branch
      %242 = sbr.rel (%p240) target = $region28
    $region27: #{tpu_custom_call.1} parent=5 // pred_region
      // Predicated region
      $region29: #{tpu_custom_call.1} parent=27 // pred_check
        %p243 = pneg %p46
      $region30: #{tpu_custom_call.1} parent=27 // pred_check_branch
        %245 = sbr.rel (%p243) target = $region32
      $region31: #{tpu_custom_call.1} parent=27 // pred_region
        %s246 = smul.u32 8, %s20
        %p247 = scmp.lt.s32.totalorder %s19, 1
        %s248 = scalar_select %p247, %s19, 1
        %p249 = scmp.lt.s32.totalorder %s246, 15
        %s250 = scalar_select %p249, %s246, 15
        %s251 = smul.addr %s250, 2
        %s252 = smul.addr %s248, 32
        %s253 = sadd.s32 %s251, %s252
        %s254 = smul.addr %s253, 8
        %s255 = scalar_lea.vmem %s0, %s254
        %s256 = smul.u32 8, %s20
      $region32: #{tpu_custom_call.1} parent=27 // pred_fallthru
        _
      // Predicated region
      $region33: #{tpu_custom_call.1} parent=27 // pred_check
        %p257 = pneg %p82
      $region34: #{tpu_custom_call.1} parent=27 // pred_check_branch
        %259 = sbr.rel (%p257) target = $region36
      $region35: #{tpu_custom_call.1} parent=27 // pred_region
        %s260 = smul.u32 %s20, 8
        %s261 = ssub.s32 %s260, 1
        %p262 = scmp.gt.s32.totalorder %s261, 0
        %s263 = scalar_select %p262, %s261, 0
        %p264 = scmp.lt.s32.totalorder %s19, 1
        %s265 = scalar_select %p264, %s19, 1
        %p266 = scmp.lt.s32.totalorder %s263, 15
        %s267 = scalar_select %p266, %s263, 15
        %s268 = smul.addr %s267, 2
        %s269 = smul.addr %s265, 32
        %s270 = sadd.s32 %s268, %s269
        %s271 = smul.addr %s270, 8
        %s272 = scalar_lea.vmem %s1, %s271
        %s273 = smul.u32 %s20, 8
        %s274 = ssub.s32 %s273, 1
        %p275 = scmp.gt.s32.totalorder %s274, 0
        %s276 = scalar_select %p275, %s274, 0
      $region36: #{tpu_custom_call.1} parent=27 // pred_fallthru
        _
      // Predicated region
      $region37: #{tpu_custom_call.1} parent=27 // pred_check
        %p277 = pneg %p118
      $region38: #{tpu_custom_call.1} parent=27 // pred_check_branch
        %279 = sbr.rel (%p277) target = $region40
      $region39: #{tpu_custom_call.1} parent=27 // pred_region
        %s280 = sadd.s32 %s20, 1
        %s281 = smul.u32 %s280, 8
        %p282 = scmp.lt.s32.totalorder %s281, 15
        %s283 = scalar_select %p282, %s281, 15
        %p284 = scmp.lt.s32.totalorder %s19, 1
        %s285 = scalar_select %p284, %s19, 1
        %p286 = scmp.lt.s32.totalorder %s283, 15
        %s287 = scalar_select %p286, %s283, 15
        %s288 = smul.addr %s287, 2
        %s289 = smul.addr %s285, 32
        %s290 = sadd.s32 %s288, %s289
        %s291 = smul.addr %s290, 8
        %s292 = scalar_lea.vmem %s2, %s291
        %s293 = sadd.s32 %s20, 1
        %s294 = smul.u32 %s293, 8
        %p295 = scmp.lt.s32.totalorder %s294, 15
        %s296 = scalar_select %p295, %s294, 15
      $region40: #{tpu_custom_call.1} parent=27 // pred_fallthru
        _
    $region28: #{tpu_custom_call.1} parent=5 // pred_fallthru
      _
    %p297 = scmp.le.s32.totalorder 1, %s12
    %p298 = scmp.lt.s32.totalorder %s12, 5
    %p299 = pnand %p297, %p298
    %p300 = pneg %p299
    // Predicated region
    $region41: #{tpu_custom_call.1} parent=5 // pred_check
      _
    $region42: #{tpu_custom_call.1} parent=5 // pred_check_branch
      %302 = sbr.rel (%p299) target = $region44
    $region43: #{tpu_custom_call.1} parent=5 // pred_region
      %s303 = ssub.s32 %s12, 1
      %s304 = smul.u32 8, %s22
      %p305 = scmp.lt.s32.totalorder %s21, 1
      %s306 = scalar_select %p305, %s21, 1
      %p307 = scmp.lt.s32.totalorder %s304, 15
      %s308 = scalar_select %p307, %s304, 15
      %s309 = smul.addr %s308, 2
      %s310 = smul.addr %s306, 32
      %s311 = sadd.s32 %s309, %s310
      %s312 = smul.addr %s311, 8
      %s313 = scalar_lea.vmem %s0, %s312
      %p314 = pneg %p52
      %p315 = pneg %p49
      %s316 = smul.u32 %s22, 8
      %s317 = ssub.s32 %s316, 1
      %p318 = scmp.gt.s32.totalorder %s317, 0
      %s319 = scalar_select %p318, %s317, 0
      %p320 = scmp.lt.s32.totalorder %s21, 1
      %s321 = scalar_select %p320, %s21, 1
      %p322 = scmp.lt.s32.totalorder %s319, 15
      %s323 = scalar_select %p322, %s319, 15
      %s324 = smul.addr %s323, 2
      %s325 = smul.addr %s321, 32
      %s326 = sadd.s32 %s324, %s325
      %s327 = smul.addr %s326, 8
      %s328 = scalar_lea.vmem %s1, %s327
      %p329 = pneg %p88
      %p330 = pneg %p85
      %s331 = sadd.s32 %s22, 1
      %s332 = smul.u32 %s331, 8
      %p333 = scmp.lt.s32.totalorder %s332, 15
      %s334 = scalar_select %p333, %s332, 15
      %p335 = scmp.lt.s32.totalorder %s21, 1
      %s336 = scalar_select %p335, %s21, 1
      %p337 = scmp.lt.s32.totalorder %s334, 15
      %s338 = scalar_select %p337, %s334, 15
      %s339 = smul.addr %s338, 2
      %s340 = smul.addr %s336, 32
      %s341 = sadd.s32 %s339, %s340
      %s342 = smul.addr %s341, 8
      %s343 = scalar_lea.vmem %s2, %s342
      %p344 = pneg %p124
      %p345 = pneg %p121
      %p346 = pneg %p145
      %p347 = pneg %p142
      %p348 = pneg %p166
      %p349 = pneg %p163
      %p350 = pneg %p187
      %p351 = pneg %p184
      %p352 = pneg %p215
      %p353 = pneg %p212
      %s354 = smul.u32 8, %s22
      %p355 = scmp.lt.s32.totalorder %s21, 1
      %s356 = scalar_select %p355, %s21, 1
      %p357 = scmp.lt.s32.totalorder %s354, 15
      %s358 = scalar_select %p357, %s354, 15
      %s359 = smul.addr %s358, 2
      %s360 = smul.addr %s356, 32
      %s361 = sadd.s32 %s359, %s360
      %s362 = smul.addr %s361, 8
      %s363 = scalar_lea.vmem %s6, %s362
      %s364 = smul.u32 8, %s22
      %p365 = scmp.lt.s32.totalorder %s21, 1
      %s366 = scalar_select %p365, %s21, 1
      %p367 = scmp.lt.s32.totalorder %s364, 15
      %s368 = scalar_select %p367, %s364, 15
      %s369 = smul.addr %s368, 2
      %s370 = smul.addr %s366, 32
      %s371 = sadd.s32 %s369, %s370
      %s372 = smul.addr %s371, 8
      %s373 = scalar_lea.vmem %s0, %s372
      %s374 = smul.u32 8, %s22
      %s375 = smul.u32 %s22, 8
      %s376 = ssub.s32 %s375, 1
      %p377 = scmp.gt.s32.totalorder %s376, 0
      %s378 = scalar_select %p377, %s376, 0
      %p379 = scmp.lt.s32.totalorder %s21, 1
      %s380 = scalar_select %p379, %s21, 1
      %p381 = scmp.lt.s32.totalorder %s378, 15
      %s382 = scalar_select %p381, %s378, 15
      %s383 = smul.addr %s382, 2
      %s384 = smul.addr %s380, 32
      %s385 = sadd.s32 %s383, %s384
      %s386 = smul.addr %s385, 8
      %s387 = scalar_lea.vmem %s1, %s386
      %s388 = smul.u32 %s22, 8
      %s389 = ssub.s32 %s388, 1
      %p390 = scmp.gt.s32.totalorder %s389, 0
      %s391 = scalar_select %p390, %s389, 0
      %s392 = sadd.s32 %s22, 1
      %s393 = smul.u32 %s392, 8
      %p394 = scmp.lt.s32.totalorder %s393, 15
      %s395 = scalar_select %p394, %s393, 15
      %p396 = scmp.lt.s32.totalorder %s21, 1
      %s397 = scalar_select %p396, %s21, 1
      %p398 = scmp.lt.s32.totalorder %s395, 15
      %s399 = scalar_select %p398, %s395, 15
      %s400 = smul.addr %s399, 2
      %s401 = smul.addr %s397, 32
      %s402 = sadd.s32 %s400, %s401
      %s403 = smul.addr %s402, 8
      %s404 = scalar_lea.vmem %s2, %s403
      %s405 = sadd.s32 %s22, 1
      %s406 = smul.u32 %s405, 8
      %p407 = scmp.lt.s32.totalorder %s406, 15
      %s408 = scalar_select %p407, %s406, 15
      %s409 = smul.u32 8, %s22
      %p410 = scmp.lt.s32.totalorder %s21, 1
      %s411 = scalar_select %p410, %s21, 1
      %p412 = scmp.lt.s32.totalorder %s409, 15
      %s413 = scalar_select %p412, %s409, 15
      %s414 = smul.addr %s413, 2
      %s415 = smul.addr %s411, 32
      %s416 = sadd.s32 %s414, %s415
      %s417 = smul.addr %s416, 8
      %s418 = scalar_lea.vmem %s6, %s417
      %s419 = smul.u32 8, %s22
      %vm420 = vcmask 24576
      %421 = vst.msk [vmem:[#allocation2] sm:$0x1] %vm420, 0.0
      %422 = vst.msk [vmem:[#allocation2 + $0x18] sm:$0x1] %vm420, 0.0
      %423 = vst.msk [vmem:[#allocation2 + $0x30] sm:$0x1] %vm420, 0.0
      %424 = vst.msk [vmem:[#allocation2 + $0x48] sm:$0x1] %vm420, 0.0
      %425 = vst.msk [vmem:[#allocation2 + $0x60] sm:$0x1] %vm420, 0.0
      %426 = vst.msk [vmem:[#allocation2 + $0x78] sm:$0x1] %vm420, 0.0
      %427 = vst.msk [vmem:[#allocation2 + $0x90] sm:$0x1] %vm420, 0.0
      %428 = vst.msk [vmem:[#allocation2 + $0xa8] sm:$0x1] %vm420, 0.0
      %429 = vst.msk [vmem:[#allocation2 + $0xc0] sm:$0x1] %vm420, 0.0
      %430 = vst.msk [vmem:[#allocation2 + $0xd8] sm:$0x1] %vm420, 0.0
      %431 = vst.msk [vmem:[#allocation2 + $0x11] sm:$0x1] %vm420, 0.0
      %432 = vst.msk [vmem:[#allocation2 + $0x29] sm:$0x1] %vm420, 0.0
      %433 = vst.msk [vmem:[#allocation2 + $0x41] sm:$0x1] %vm420, 0.0
      %434 = vst.msk [vmem:[#allocation2 + $0x59] sm:$0x1] %vm420, 0.0
      %435 = vst.msk [vmem:[#allocation2 + $0x71] sm:$0x1] %vm420, 0.0
      %436 = vst.msk [vmem:[#allocation2 + $0x89] sm:$0x1] %vm420, 0.0
      %437 = vst.msk [vmem:[#allocation2 + $0xa1] sm:$0x1] %vm420, 0.0
      %438 = vst.msk [vmem:[#allocation2 + $0xb9] sm:$0x1] %vm420, 0.0
      %439 = vst.msk [vmem:[#allocation2 + $0xd1] sm:$0x1] %vm420, 0.0
      %440 = vst.msk [vmem:[#allocation2 + $0xe9] sm:$0x1] %vm420, 0.0
      %v441 = vld [vmem:[%s373] sm:$0xff]
      %v442 = vld [vmem:[%s373 + $0x8] sm:$0xff]
      %v443 = vld [vmem:[%s373 + $0x10] sm:$0xff]
      %v444 = vld [vmem:[%s373 + $0x18] sm:$0xff]
      %v445 = vld [vmem:[%s373 + $0x20] sm:$0xff]
      %v446 = vld [vmem:[%s373 + $0x28] sm:$0xff]
      %v447 = vld [vmem:[%s373 + $0x30] sm:$0xff]
      %v448 = vld [vmem:[%s373 + $0x38] sm:$0xff]
      %v449 = vld [vmem:[%s373 + $0x40] sm:$0xff]
      %v450 = vld [vmem:[%s373 + $0x48] sm:$0xff]
      %v451 = vld [vmem:[%s373 + $0x50] sm:$0xff]
      %v452 = vld [vmem:[%s373 + $0x58] sm:$0xff]
      %v453 = vld [vmem:[%s373 + $0x60] sm:$0xff]
      %v454 = vld [vmem:[%s373 + $0x68] sm:$0xff]
      %v455 = vld [vmem:[%s373 + $0x70] sm:$0xff]
      %v456 = vld [vmem:[%s373 + $0x78] sm:$0xff]
      %s457 = scalar_lea.vmem [#allocation2], 24
      %vm458 = vcmask 31744
      %459 = vst.msk [vmem:[%s457 + $0x1] sm:$0xff] %vm458, %v441
      %460 = vst.msk [vmem:[%s457 + $0x9] sm:$0xff] %vm458, %v442
      %461 = vst.msk [vmem:[%s457 + $0x19] sm:$0xff] %vm458, %v443
      %462 = vst.msk [vmem:[%s457 + $0x21] sm:$0xff] %vm458, %v444
      %463 = vst.msk [vmem:[%s457 + $0x31] sm:$0xff] %vm458, %v445
      %464 = vst.msk [vmem:[%s457 + $0x39] sm:$0xff] %vm458, %v446
      %465 = vst.msk [vmem:[%s457 + $0x49] sm:$0xff] %vm458, %v447
      %466 = vst.msk [vmem:[%s457 + $0x51] sm:$0xff] %vm458, %v448
      %467 = vst.msk [vmem:[%s457 + $0x61] sm:$0xff] %vm458, %v449
      %468 = vst.msk [vmem:[%s457 + $0x69] sm:$0xff] %vm458, %v450
      %469 = vst.msk [vmem:[%s457 + $0x79] sm:$0xff] %vm458, %v451
      %470 = vst.msk [vmem:[%s457 + $0x81] sm:$0xff] %vm458, %v452
      %471 = vst.msk [vmem:[%s457 + $0x91] sm:$0xff] %vm458, %v453
      %472 = vst.msk [vmem:[%s457 + $0x99] sm:$0xff] %vm458, %v454
      %473 = vst.msk [vmem:[%s457 + $0xa9] sm:$0xff] %vm458, %v455
      %474 = vst.msk [vmem:[%s457 + $0xb1] sm:$0xff] %vm458, %v456
      %v475 = vld [vmem:[%s387] sm:$0xff]
      %v476 = vld [vmem:[%s387 + $0x8] sm:$0xff]
      %477 = vst.msk [vmem:[#allocation2 + $0x1] sm:$0xff] %vm458, %v475
      %478 = vst.msk [vmem:[#allocation2 + $0x9] sm:$0xff] %vm458, %v476
      %v479 = vld [vmem:[%s404] sm:$0xff]
      %v480 = vld [vmem:[%s404 + $0x8] sm:$0xff]
      %s481 = scalar_lea.vmem [#allocation2], 216
      %482 = vst.msk [vmem:[%s481 + $0x1] sm:$0xff] %vm458, %v479
      %483 = vst.msk [vmem:[%s481 + $0x9] sm:$0xff] %vm458, %v480
      %p484 = scmp.eq.s32.totalorder %s22, 0
      // Predicated region
      $region45: #{tpu_custom_call.1} parent=43 // pred_check
        %p485 = pneg %p484
      $region46: #{tpu_custom_call.1} parent=43 // pred_check_branch
        %487 = sbr.rel (%p485) target = $region48
      $region47: #{tpu_custom_call.1} parent=43 // pred_region
        %488 = vst.msk [vmem:[#allocation2 + $0x1] sm:$0xff] %vm458, 0.0
        %489 = vst.msk [vmem:[#allocation2 + $0x9] sm:$0xff] %vm458, 0.0
      $region48: #{tpu_custom_call.1} parent=43 // pred_fallthru
        _
      %p490 = scmp.eq.s32.totalorder %s22, 1
      // Predicated region
      $region49: #{tpu_custom_call.1} parent=43 // pred_check
        %p491 = pneg %p490
      $region50: #{tpu_custom_call.1} parent=43 // pred_check_branch
        %493 = sbr.rel (%p491) target = $region52
      $region51: #{tpu_custom_call.1} parent=43 // pred_region
        %494 = vst.msk [vmem:[%s481 + $0x1] sm:$0xff] %vm458, 0.0
        %495 = vst.msk [vmem:[%s481 + $0x9] sm:$0xff] %vm458, 0.0
      $region52: #{tpu_custom_call.1} parent=43 // pred_fallthru
        _
      %v496 = vld [vmem:[#allocation2] sm:$0xff]
      %v497 = vld [vmem:[#allocation2 + $0x8] sm:$0xff]
      %v498 = vld [vmem:[#allocation2 + $0x18] sm:$0xff]
      %v499 = vld [vmem:[#allocation2 + $0x20] sm:$0xff]
      %v500 = vld [vmem:[#allocation2 + $0x30] sm:$0xff]
      %v501 = vld [vmem:[#allocation2 + $0x38] sm:$0xff]
      %v502 = vld [vmem:[#allocation2 + $0x48] sm:$0xff]
      %v503 = vld [vmem:[#allocation2 + $0x50] sm:$0xff]
      %v504 = vld [vmem:[#allocation2 + $0x60] sm:$0xff]
      %v505 = vld [vmem:[#allocation2 + $0x68] sm:$0xff]
      %v506 = vld [vmem:[#allocation2 + $0x78] sm:$0xff]
      %v507 = vld [vmem:[#allocation2 + $0x80] sm:$0xff]
      %v508 = vld [vmem:[#allocation2 + $0x90] sm:$0xff]
      %v509 = vld [vmem:[#allocation2 + $0x98] sm:$0xff]
      %v510 = vld [vmem:[#allocation2 + $0xa8] sm:$0xff]
      %v511 = vld [vmem:[#allocation2 + $0xb0] sm:$0xff]
      %v512 = vld [vmem:[%s3] sm:$0x1]
      %v513 = vlaneseq
      %v514 = vshrl.u32 %v513, 7
      %v515 = vsub.s32 0, %v514
      %v516 = vrot.slane %v512, %v515
      %v517 = vmul.f32 %v496, %v516
      %v518 = vmul.f32 %v497, %v516
      %v519 = vmul.f32 %v498, %v516
      %v520 = vmul.f32 %v499, %v516
      %v521 = vmul.f32 %v500, %v516
      %v522 = vmul.f32 %v501, %v516
      %v523 = vmul.f32 %v502, %v516
      %v524 = vmul.f32 %v503, %v516
      %v525 = vmul.f32 %v504, %v516
      %v526 = vmul.f32 %v505, %v516
      %v527 = vmul.f32 %v506, %v516
      %v528 = vmul.f32 %v507, %v516
      %v529 = vmul.f32 %v508, %v516
      %v530 = vmul.f32 %v509, %v516
      %v531 = vmul.f32 %v510, %v516
      %v532 = vmul.f32 %v511, %v516
      %v533 = vadd.f32 %v517, 0.0
      %v534 = vadd.f32 %v518, 0.0
      %v535 = vadd.f32 %v519, 0.0
      %v536 = vadd.f32 %v520, 0.0
      %v537 = vadd.f32 %v521, 0.0
      %v538 = vadd.f32 %v522, 0.0
      %v539 = vadd.f32 %v523, 0.0
      %v540 = vadd.f32 %v524, 0.0
      %v541 = vadd.f32 %v525, 0.0
      %v542 = vadd.f32 %v526, 0.0
      %v543 = vadd.f32 %v527, 0.0
      %v544 = vadd.f32 %v528, 0.0
      %v545 = vadd.f32 %v529, 0.0
      %v546 = vadd.f32 %v530, 0.0
      %v547 = vadd.f32 %v531, 0.0
      %v548 = vadd.f32 %v532, 0.0
      %v549 = vld [vmem:[#allocation2 + $0x1] sm:$0xff]
      %v550 = vld [vmem:[#allocation2 + $0x9] sm:$0xff]
      %v551 = vld [vmem:[#allocation2 + $0x19] sm:$0xff]
      %v552 = vld [vmem:[#allocation2 + $0x21] sm:$0xff]
      %v553 = vld [vmem:[#allocation2 + $0x31] sm:$0xff]
      %v554 = vld [vmem:[#allocation2 + $0x39] sm:$0xff]
      %v555 = vld [vmem:[#allocation2 + $0x49] sm:$0xff]
      %v556 = vld [vmem:[#allocation2 + $0x51] sm:$0xff]
      %v557 = vld [vmem:[#allocation2 + $0x61] sm:$0xff]
      %v558 = vld [vmem:[#allocation2 + $0x69] sm:$0xff]
      %v559 = vld [vmem:[#allocation2 + $0x79] sm:$0xff]
      %v560 = vld [vmem:[#allocation2 + $0x81] sm:$0xff]
      %v561 = vld [vmem:[#allocation2 + $0x91] sm:$0xff]
      %v562 = vld [vmem:[#allocation2 + $0x99] sm:$0xff]
      %v563 = vld [vmem:[#allocation2 + $0xa9] sm:$0xff]
      %v564 = vld [vmem:[#allocation2 + $0xb1] sm:$0xff]
      %v565 = vld [vmem:[%s3 + $0x1] sm:$0x1]
      %v566 = vlaneseq
      %v567 = vshrl.u32 %v566, 7
      %v568 = vsub.s32 0, %v567
      %v569 = vrot.slane %v565, %v568
      %v570 = vmul.f32 %v549, %v569
      %v571 = vmul.f32 %v550, %v569
      %v572 = vmul.f32 %v551, %v569
      %v573 = vmul.f32 %v552, %v569
      %v574 = vmul.f32 %v553, %v569
      %v575 = vmul.f32 %v554, %v569
      %v576 = vmul.f32 %v555, %v569
      %v577 = vmul.f32 %v556, %v569
      %v578 = vmul.f32 %v557, %v569
      %v579 = vmul.f32 %v558, %v569
      %v580 = vmul.f32 %v559, %v569
      %v581 = vmul.f32 %v560, %v569
      %v582 = vmul.f32 %v561, %v569
      %v583 = vmul.f32 %v562, %v569
      %v584 = vmul.f32 %v563, %v569
      %v585 = vmul.f32 %v564, %v569
      %v586 = vadd.f32 %v533, %v570
      %v587 = vadd.f32 %v534, %v571
      %v588 = vadd.f32 %v535, %v572
      %v589 = vadd.f32 %v536, %v573
      %v590 = vadd.f32 %v537, %v574
      %v591 = vadd.f32 %v538, %v575
      %v592 = vadd.f32 %v539, %v576
      %v593 = vadd.f32 %v540, %v577
      %v594 = vadd.f32 %v541, %v578
      %v595 = vadd.f32 %v542, %v579
      %v596 = vadd.f32 %v543, %v580
      %v597 = vadd.f32 %v544, %v581
      %v598 = vadd.f32 %v545, %v582
      %v599 = vadd.f32 %v546, %v583
      %v600 = vadd.f32 %v547, %v584
      %v601 = vadd.f32 %v548, %v585
      %v602 = vld [vmem:[#allocation2 + $0x2] sm:$0xff]
      %v603 = vld [vmem:[#allocation2 + $0xa] sm:$0xff]
      %v604 = vld [vmem:[#allocation2 + $0x1a] sm:$0xff]
      %v605 = vld [vmem:[#allocation2 + $0x22] sm:$0xff]
      %v606 = vld [vmem:[#allocation2 + $0x32] sm:$0xff]
      %v607 = vld [vmem:[#allocation2 + $0x3a] sm:$0xff]
      %v608 = vld [vmem:[#allocation2 + $0x4a] sm:$0xff]
      %v609 = vld [vmem:[#allocation2 + $0x52] sm:$0xff]
      %v610 = vld [vmem:[#allocation2 + $0x62] sm:$0xff]
      %v611 = vld [vmem:[#allocation2 + $0x6a] sm:$0xff]
      %v612 = vld [vmem:[#allocation2 + $0x7a] sm:$0xff]
      %v613 = vld [vmem:[#allocation2 + $0x82] sm:$0xff]
      %v614 = vld [vmem:[#allocation2 + $0x92] sm:$0xff]
      %v615 = vld [vmem:[#allocation2 + $0x9a] sm:$0xff]
      %v616 = vld [vmem:[#allocation2 + $0xaa] sm:$0xff]
      %v617 = vld [vmem:[#allocation2 + $0xb2] sm:$0xff]
      %v618 = vld [vmem:[%s3 + $0x2] sm:$0x1]
      %v619 = vlaneseq
      %v620 = vshrl.u32 %v619, 7
      %v621 = vsub.s32 0, %v620
      %v622 = vrot.slane %v618, %v621
      %v623 = vmul.f32 %v602, %v622
      %v624 = vmul.f32 %v603, %v622
      %v625 = vmul.f32 %v604, %v622
      %v626 = vmul.f32 %v605, %v622
      %v627 = vmul.f32 %v606, %v622
      %v628 = vmul.f32 %v607, %v622
      %v629 = vmul.f32 %v608, %v622
      %v630 = vmul.f32 %v609, %v622
      %v631 = vmul.f32 %v610, %v622
      %v632 = vmul.f32 %v611, %v622
      %v633 = vmul.f32 %v612, %v622
      %v634 = vmul.f32 %v613, %v622
      %v635 = vmul.f32 %v614, %v622
      %v636 = vmul.f32 %v615, %v622
      %v637 = vmul.f32 %v616, %v622
      %v638 = vmul.f32 %v617, %v622
      %v639 = vadd.f32 %v586, %v623
      %v640 = vadd.f32 %v587, %v624
      %v641 = vadd.f32 %v588, %v625
      %v642 = vadd.f32 %v589, %v626
      %v643 = vadd.f32 %v590, %v627
      %v644 = vadd.f32 %v591, %v628
      %v645 = vadd.f32 %v592, %v629
      %v646 = vadd.f32 %v593, %v630
      %v647 = vadd.f32 %v594, %v631
      %v648 = vadd.f32 %v595, %v632
      %v649 = vadd.f32 %v596, %v633
      %v650 = vadd.f32 %v597, %v634
      %v651 = vadd.f32 %v598, %v635
      %v652 = vadd.f32 %v599, %v636
      %v653 = vadd.f32 %v600, %v637
      %v654 = vadd.f32 %v601, %v638
      %v655 = vld [vmem:[%s457] sm:$0xff]
      %v656 = vld [vmem:[%s457 + $0x8] sm:$0xff]
      %v657 = vld [vmem:[%s457 + $0x18] sm:$0xff]
      %v658 = vld [vmem:[%s457 + $0x20] sm:$0xff]
      %v659 = vld [vmem:[%s457 + $0x30] sm:$0xff]
      %v660 = vld [vmem:[%s457 + $0x38] sm:$0xff]
      %v661 = vld [vmem:[%s457 + $0x48] sm:$0xff]
      %v662 = vld [vmem:[%s457 + $0x50] sm:$0xff]
      %v663 = vld [vmem:[%s457 + $0x60] sm:$0xff]
      %v664 = vld [vmem:[%s457 + $0x68] sm:$0xff]
      %v665 = vld [vmem:[%s457 + $0x78] sm:$0xff]
      %v666 = vld [vmem:[%s457 + $0x80] sm:$0xff]
      %v667 = vld [vmem:[%s457 + $0x90] sm:$0xff]
      %v668 = vld [vmem:[%s457 + $0x98] sm:$0xff]
      %v669 = vld [vmem:[%s457 + $0xa8] sm:$0xff]
      %v670 = vld [vmem:[%s457 + $0xb0] sm:$0xff]
      %s671 = scalar_lea.vmem %s3, 4
      %v672 = vld [vmem:[%s671] sm:$0x1]
      %v673 = vlaneseq
      %v674 = vshrl.u32 %v673, 7
      %v675 = vsub.s32 0, %v674
      %v676 = vrot.slane %v672, %v675
      %v677 = vmul.f32 %v655, %v676
      %v678 = vmul.f32 %v656, %v676
      %v679 = vmul.f32 %v657, %v676
      %v680 = vmul.f32 %v658, %v676
      %v681 = vmul.f32 %v659, %v676
      %v682 = vmul.f32 %v660, %v676
      %v683 = vmul.f32 %v661, %v676
      %v684 = vmul.f32 %v662, %v676
      %v685 = vmul.f32 %v663, %v676
      %v686 = vmul.f32 %v664, %v676
      %v687 = vmul.f32 %v665, %v676
      %v688 = vmul.f32 %v666, %v676
      %v689 = vmul.f32 %v667, %v676
      %v690 = vmul.f32 %v668, %v676
      %v691 = vmul.f32 %v669, %v676
      %v692 = vmul.f32 %v670, %v676
      %v693 = vadd.f32 %v639, %v677
      %v694 = vadd.f32 %v640, %v678
      %v695 = vadd.f32 %v641, %v679
      %v696 = vadd.f32 %v642, %v680
      %v697 = vadd.f32 %v643, %v681
      %v698 = vadd.f32 %v644, %v682
      %v699 = vadd.f32 %v645, %v683
      %v700 = vadd.f32 %v646, %v684
      %v701 = vadd.f32 %v647, %v685
      %v702 = vadd.f32 %v648, %v686
      %v703 = vadd.f32 %v649, %v687
      %v704 = vadd.f32 %v650, %v688
      %v705 = vadd.f32 %v651, %v689
      %v706 = vadd.f32 %v652, %v690
      %v707 = vadd.f32 %v653, %v691
      %v708 = vadd.f32 %v654, %v692
      %v709 = vld [vmem:[%s457 + $0x1] sm:$0xff]
      %v710 = vld [vmem:[%s457 + $0x9] sm:$0xff]
      %v711 = vld [vmem:[%s457 + $0x19] sm:$0xff]
      %v712 = vld [vmem:[%s457 + $0x21] sm:$0xff]
      %v713 = vld [vmem:[%s457 + $0x31] sm:$0xff]
      %v714 = vld [vmem:[%s457 + $0x39] sm:$0xff]
      %v715 = vld [vmem:[%s457 + $0x49] sm:$0xff]
      %v716 = vld [vmem:[%s457 + $0x51] sm:$0xff]
      %v717 = vld [vmem:[%s457 + $0x61] sm:$0xff]
      %v718 = vld [vmem:[%s457 + $0x69] sm:$0xff]
      %v719 = vld [vmem:[%s457 + $0x79] sm:$0xff]
      %v720 = vld [vmem:[%s457 + $0x81] sm:$0xff]
      %v721 = vld [vmem:[%s457 + $0x91] sm:$0xff]
      %v722 = vld [vmem:[%s457 + $0x99] sm:$0xff]
      %v723 = vld [vmem:[%s457 + $0xa9] sm:$0xff]
      %v724 = vld [vmem:[%s457 + $0xb1] sm:$0xff]
      %v725 = vld [vmem:[%s671 + $0x1] sm:$0x1]
      %v726 = vlaneseq
      %v727 = vshrl.u32 %v726, 7
      %v728 = vsub.s32 0, %v727
      %v729 = vrot.slane %v725, %v728
      %v730 = vmul.f32 %v709, %v729
      %v731 = vmul.f32 %v710, %v729
      %v732 = vmul.f32 %v711, %v729
      %v733 = vmul.f32 %v712, %v729
      %v734 = vmul.f32 %v713, %v729
      %v735 = vmul.f32 %v714, %v729
      %v736 = vmul.f32 %v715, %v729
      %v737 = vmul.f32 %v716, %v729
      %v738 = vmul.f32 %v717, %v729
      %v739 = vmul.f32 %v718, %v729
      %v740 = vmul.f32 %v719, %v729
      %v741 = vmul.f32 %v720, %v729
      %v742 = vmul.f32 %v721, %v729
      %v743 = vmul.f32 %v722, %v729
      %v744 = vmul.f32 %v723, %v729
      %v745 = vmul.f32 %v724, %v729
      %v746 = vadd.f32 %v693, %v730
      %v747 = vadd.f32 %v694, %v731
      %v748 = vadd.f32 %v695, %v732
      %v749 = vadd.f32 %v696, %v733
      %v750 = vadd.f32 %v697, %v734
      %v751 = vadd.f32 %v698, %v735
      %v752 = vadd.f32 %v699, %v736
      %v753 = vadd.f32 %v700, %v737
      %v754 = vadd.f32 %v701, %v738
      %v755 = vadd.f32 %v702, %v739
      %v756 = vadd.f32 %v703, %v740
      %v757 = vadd.f32 %v704, %v741
      %v758 = vadd.f32 %v705, %v742
      %v759 = vadd.f32 %v706, %v743
      %v760 = vadd.f32 %v707, %v744
      %v761 = vadd.f32 %v708, %v745
      %v762 = vld [vmem:[%s457 + $0x2] sm:$0xff]
      %v763 = vld [vmem:[%s457 + $0xa] sm:$0xff]
      %v764 = vld [vmem:[%s457 + $0x1a] sm:$0xff]
      %v765 = vld [vmem:[%s457 + $0x22] sm:$0xff]
      %v766 = vld [vmem:[%s457 + $0x32] sm:$0xff]
      %v767 = vld [vmem:[%s457 + $0x3a] sm:$0xff]
      %v768 = vld [vmem:[%s457 + $0x4a] sm:$0xff]
      %v769 = vld [vmem:[%s457 + $0x52] sm:$0xff]
      %v770 = vld [vmem:[%s457 + $0x62] sm:$0xff]
      %v771 = vld [vmem:[%s457 + $0x6a] sm:$0xff]
      %v772 = vld [vmem:[%s457 + $0x7a] sm:$0xff]
      %v773 = vld [vmem:[%s457 + $0x82] sm:$0xff]
      %v774 = vld [vmem:[%s457 + $0x92] sm:$0xff]
      %v775 = vld [vmem:[%s457 + $0x9a] sm:$0xff]
      %v776 = vld [vmem:[%s457 + $0xaa] sm:$0xff]
      %v777 = vld [vmem:[%s457 + $0xb2] sm:$0xff]
      %v778 = vld [vmem:[%s671 + $0x2] sm:$0x1]
      %v779 = vlaneseq
      %v780 = vshrl.u32 %v779, 7
      %v781 = vsub.s32 0, %v780
      %v782 = vrot.slane %v778, %v781
      %v783 = vmul.f32 %v762, %v782
      %v784 = vmul.f32 %v763, %v782
      %v785 = vmul.f32 %v764, %v782
      %v786 = vmul.f32 %v765, %v782
      %v787 = vmul.f32 %v766, %v782
      %v788 = vmul.f32 %v767, %v782
      %v789 = vmul.f32 %v768, %v782
      %v790 = vmul.f32 %v769, %v782
      %v791 = vmul.f32 %v770, %v782
      %v792 = vmul.f32 %v771, %v782
      %v793 = vmul.f32 %v772, %v782
      %v794 = vmul.f32 %v773, %v782
      %v795 = vmul.f32 %v774, %v782
      %v796 = vmul.f32 %v775, %v782
      %v797 = vmul.f32 %v776, %v782
      %v798 = vmul.f32 %v777, %v782
      %v799 = vadd.f32 %v746, %v783
      %v800 = vadd.f32 %v747, %v784
      %v801 = vadd.f32 %v748, %v785
      %v802 = vadd.f32 %v749, %v786
      %v803 = vadd.f32 %v750, %v787
      %v804 = vadd.f32 %v751, %v788
      %v805 = vadd.f32 %v752, %v789
      %v806 = vadd.f32 %v753, %v790
      %v807 = vadd.f32 %v754, %v791
      %v808 = vadd.f32 %v755, %v792
      %v809 = vadd.f32 %v756, %v793
      %v810 = vadd.f32 %v757, %v794
      %v811 = vadd.f32 %v758, %v795
      %v812 = vadd.f32 %v759, %v796
      %v813 = vadd.f32 %v760, %v797
      %v814 = vadd.f32 %v761, %v798
      %s815 = scalar_lea.vmem [#allocation2], 48
      %v816 = vld [vmem:[%s815] sm:$0xff]
      %v817 = vld [vmem:[%s815 + $0x8] sm:$0xff]
      %v818 = vld [vmem:[%s815 + $0x18] sm:$0xff]
      %v819 = vld [vmem:[%s815 + $0x20] sm:$0xff]
      %v820 = vld [vmem:[%s815 + $0x30] sm:$0xff]
      %v821 = vld [vmem:[%s815 + $0x38] sm:$0xff]
      %v822 = vld [vmem:[%s815 + $0x48] sm:$0xff]
      %v823 = vld [vmem:[%s815 + $0x50] sm:$0xff]
      %v824 = vld [vmem:[%s815 + $0x60] sm:$0xff]
      %v825 = vld [vmem:[%s815 + $0x68] sm:$0xff]
      %v826 = vld [vmem:[%s815 + $0x78] sm:$0xff]
      %v827 = vld [vmem:[%s815 + $0x80] sm:$0xff]
      %v828 = vld [vmem:[%s815 + $0x90] sm:$0xff]
      %v829 = vld [vmem:[%s815 + $0x98] sm:$0xff]
      %v830 = vld [vmem:[%s815 + $0xa8] sm:$0xff]
      %v831 = vld [vmem:[%s815 + $0xb0] sm:$0xff]
      %s832 = scalar_lea.vmem %s3, 8
      %v833 = vld [vmem:[%s832] sm:$0x1]
      %v834 = vlaneseq
      %v835 = vshrl.u32 %v834, 7
      %v836 = vsub.s32 0, %v835
      %v837 = vrot.slane %v833, %v836
      %v838 = vmul.f32 %v816, %v837
      %v839 = vmul.f32 %v817, %v837
      %v840 = vmul.f32 %v818, %v837
      %v841 = vmul.f32 %v819, %v837
      %v842 = vmul.f32 %v820, %v837
      %v843 = vmul.f32 %v821, %v837
      %v844 = vmul.f32 %v822, %v837
      %v845 = vmul.f32 %v823, %v837
      %v846 = vmul.f32 %v824, %v837
      %v847 = vmul.f32 %v825, %v837
      %v848 = vmul.f32 %v826, %v837
      %v849 = vmul.f32 %v827, %v837
      %v850 = vmul.f32 %v828, %v837
      %v851 = vmul.f32 %v829, %v837
      %v852 = vmul.f32 %v830, %v837
      %v853 = vmul.f32 %v831, %v837
      %v854 = vadd.f32 %v799, %v838
      %v855 = vadd.f32 %v800, %v839
      %v856 = vadd.f32 %v801, %v840
      %v857 = vadd.f32 %v802, %v841
      %v858 = vadd.f32 %v803, %v842
      %v859 = vadd.f32 %v804, %v843
      %v860 = vadd.f32 %v805, %v844
      %v861 = vadd.f32 %v806, %v845
      %v862 = vadd.f32 %v807, %v846
      %v863 = vadd.f32 %v808, %v847
      %v864 = vadd.f32 %v809, %v848
      %v865 = vadd.f32 %v810, %v849
      %v866 = vadd.f32 %v811, %v850
      %v867 = vadd.f32 %v812, %v851
      %v868 = vadd.f32 %v813, %v852
      %v869 = vadd.f32 %v814, %v853
      %v870 = vld [vmem:[%s815 + $0x1] sm:$0xff]
      %v871 = vld [vmem:[%s815 + $0x9] sm:$0xff]
      %v872 = vld [vmem:[%s815 + $0x19] sm:$0xff]
      %v873 = vld [vmem:[%s815 + $0x21] sm:$0xff]
      %v874 = vld [vmem:[%s815 + $0x31] sm:$0xff]
      %v875 = vld [vmem:[%s815 + $0x39] sm:$0xff]
      %v876 = vld [vmem:[%s815 + $0x49] sm:$0xff]
      %v877 = vld [vmem:[%s815 + $0x51] sm:$0xff]
      %v878 = vld [vmem:[%s815 + $0x61] sm:$0xff]
      %v879 = vld [vmem:[%s815 + $0x69] sm:$0xff]
      %v880 = vld [vmem:[%s815 + $0x79] sm:$0xff]
      %v881 = vld [vmem:[%s815 + $0x81] sm:$0xff]
      %v882 = vld [vmem:[%s815 + $0x91] sm:$0xff]
      %v883 = vld [vmem:[%s815 + $0x99] sm:$0xff]
      %v884 = vld [vmem:[%s815 + $0xa9] sm:$0xff]
      %v885 = vld [vmem:[%s815 + $0xb1] sm:$0xff]
      %v886 = vld [vmem:[%s832 + $0x1] sm:$0x1]
      %v887 = vlaneseq
      %v888 = vshrl.u32 %v887, 7
      %v889 = vsub.s32 0, %v888
      %v890 = vrot.slane %v886, %v889
      %v891 = vmul.f32 %v870, %v890
      %v892 = vmul.f32 %v871, %v890
      %v893 = vmul.f32 %v872, %v890
      %v894 = vmul.f32 %v873, %v890
      %v895 = vmul.f32 %v874, %v890
      %v896 = vmul.f32 %v875, %v890
      %v897 = vmul.f32 %v876, %v890
      %v898 = vmul.f32 %v877, %v890
      %v899 = vmul.f32 %v878, %v890
      %v900 = vmul.f32 %v879, %v890
      %v901 = vmul.f32 %v880, %v890
      %v902 = vmul.f32 %v881, %v890
      %v903 = vmul.f32 %v882, %v890
      %v904 = vmul.f32 %v883, %v890
      %v905 = vmul.f32 %v884, %v890
      %v906 = vmul.f32 %v885, %v890
      %v907 = vadd.f32 %v854, %v891
      %v908 = vadd.f32 %v855, %v892
      %v909 = vadd.f32 %v856, %v893
      %v910 = vadd.f32 %v857, %v894
      %v911 = vadd.f32 %v858, %v895
      %v912 = vadd.f32 %v859, %v896
      %v913 = vadd.f32 %v860, %v897
      %v914 = vadd.f32 %v861, %v898
      %v915 = vadd.f32 %v862, %v899
      %v916 = vadd.f32 %v863, %v900
      %v917 = vadd.f32 %v864, %v901
      %v918 = vadd.f32 %v865, %v902
      %v919 = vadd.f32 %v866, %v903
      %v920 = vadd.f32 %v867, %v904
      %v921 = vadd.f32 %v868, %v905
      %v922 = vadd.f32 %v869, %v906
      %v923 = vld [vmem:[%s815 + $0x2] sm:$0xff]
      %v924 = vld [vmem:[%s815 + $0xa] sm:$0xff]
      %v925 = vld [vmem:[%s815 + $0x1a] sm:$0xff]
      %v926 = vld [vmem:[%s815 + $0x22] sm:$0xff]
      %v927 = vld [vmem:[%s815 + $0x32] sm:$0xff]
      %v928 = vld [vmem:[%s815 + $0x3a] sm:$0xff]
      %v929 = vld [vmem:[%s815 + $0x4a] sm:$0xff]
      %v930 = vld [vmem:[%s815 + $0x52] sm:$0xff]
      %v931 = vld [vmem:[%s815 + $0x62] sm:$0xff]
      %v932 = vld [vmem:[%s815 + $0x6a] sm:$0xff]
      %v933 = vld [vmem:[%s815 + $0x7a] sm:$0xff]
      %v934 = vld [vmem:[%s815 + $0x82] sm:$0xff]
      %v935 = vld [vmem:[%s815 + $0x92] sm:$0xff]
      %v936 = vld [vmem:[%s815 + $0x9a] sm:$0xff]
      %v937 = vld [vmem:[%s815 + $0xaa] sm:$0xff]
      %v938 = vld [vmem:[%s815 + $0xb2] sm:$0xff]
      %v939 = vld [vmem:[%s832 + $0x2] sm:$0x1]
      %v940 = vlaneseq
      %v941 = vshrl.u32 %v940, 7
      %v942 = vsub.s32 0, %v941
      %v943 = vrot.slane %v939, %v942
      %v944 = vmul.f32 %v923, %v943
      %v945 = vmul.f32 %v924, %v943
      %v946 = vmul.f32 %v925, %v943
      %v947 = vmul.f32 %v926, %v943
      %v948 = vmul.f32 %v927, %v943
      %v949 = vmul.f32 %v928, %v943
      %v950 = vmul.f32 %v929, %v943
      %v951 = vmul.f32 %v930, %v943
      %v952 = vmul.f32 %v931, %v943
      %v953 = vmul.f32 %v932, %v943
      %v954 = vmul.f32 %v933, %v943
      %v955 = vmul.f32 %v934, %v943
      %v956 = vmul.f32 %v935, %v943
      %v957 = vmul.f32 %v936, %v943
      %v958 = vmul.f32 %v937, %v943
      %v959 = vmul.f32 %v938, %v943
      %v960 = vadd.f32 %v907, %v944
      %v961 = vadd.f32 %v908, %v945
      %v962 = vadd.f32 %v909, %v946
      %v963 = vadd.f32 %v910, %v947
      %v964 = vadd.f32 %v911, %v948
      %v965 = vadd.f32 %v912, %v949
      %v966 = vadd.f32 %v913, %v950
      %v967 = vadd.f32 %v914, %v951
      %v968 = vadd.f32 %v915, %v952
      %v969 = vadd.f32 %v916, %v953
      %v970 = vadd.f32 %v917, %v954
      %v971 = vadd.f32 %v918, %v955
      %v972 = vadd.f32 %v919, %v956
      %v973 = vadd.f32 %v920, %v957
      %v974 = vadd.f32 %v921, %v958
      %v975 = vadd.f32 %v922, %v959
      %v976 = vld [vmem:[%s4] sm:$0xf]
      %v977 = vld [vmem:[%s5] sm:$0x1]
      %v979 = vlaneseq
      %v980 = vshrl.u32 %v979, 7
      %v981 = vsub.s32 0, %v980
      %v982 = vrot.slane %v977, %v981
      %v985 = vsel %vm458, %v960, 0
      %v988 = vsel %vm458, %v961, 0
      %v991 = vsel %vm458, %v962, 0
      %v994 = vsel %vm458, %v963, 0
      %v997 = vsel %vm458, %v964, 0
      %v1000 = vsel %vm458, %v965, 0
      %v1003 = vsel %vm458, %v966, 0
      %v1006 = vsel %vm458, %v967, 0
      %v1009 = vsel %vm458, %v968, 0
      %v1012 = vsel %vm458, %v969, 0
      %v1015 = vsel %vm458, %v970, 0
      %v1018 = vsel %vm458, %v971, 0
      %v1021 = vsel %vm458, %v972, 0
      %v1024 = vsel %vm458, %v973, 0
      %v1027 = vsel %vm458, %v974, 0
      %v1030 = vsel %vm458, %v975, 0
      %vm1032 = vcmask 1043456
      %v1034 = vsel %vm1032, %v976, 0
      %1036 = vmatprep.subr.mxu0 0.0
      %1037 = vmatpush1.msra.mxu0 0.0
      %1038 = vmatprep.subr.mxu0 0.0
      %1039 = vmatpush1.msra.mxu0 0.0
      %1040 = vmatprep.subr.mxu0 0.0
      %1041 = vmatpush1.msra.mxu0 0.0
      %1042 = vmatprep.subr.mxu0 0.0
      %1043 = vmatpush1.msra.mxu0 0.0
      %1044 = vmatprep.subr.mxu0 0.0
      %1045 = vmatpush1.msra.mxu0 0.0
      %1046 = vmatprep.subr.mxu0 0.0
      %1047 = vmatpush1.msra.mxu0 0.0
      %1048 = vmatprep.subr.mxu0 0.0
      %1049 = vmatpush1.msra.mxu0 0.0
      %1050 = vmatprep.subr.mxu0 0.0
      %1051 = vmatpush1.msra.mxu0 0.0
      %1052 = vmatprep.subr.mxu0 0.0
      %1053 = vmatpush1.msra.mxu0 0.0
      %1054 = vmatprep.subr.mxu0 0.0
      %1055 = vmatpush1.msra.mxu0 0.0
      %1056 = vmatprep.subr.mxu0 0.0
      %1057 = vmatpush1.msra.mxu0 0.0
      %1058 = vmatprep.subr.mxu0 0.0
      %1059 = vmatpush1.msra.mxu0 0.0
      %1060 = vmatprep.subr.mxu0 0.0
      %1061 = vmatpush1.msra.mxu0 0.0
      %1062 = vmatprep.subr.mxu0 0.0
      %1063 = vmatpush1.msra.mxu0 0.0
      %1064 = vmatprep.subr.mxu0 0.0
      %1065 = vmatpush1.msra.mxu0 0.0
      %1066 = vmatprep.subr.mxu0 0.0
      %1067 = vmatpush1.msra.mxu0 %v1034
      %1068 = vmatprep.subr.mxu0 0.0
      %1069 = vmatpush2.msra.mxu0 0.0
      %1070 = vmatprep.subr.mxu0 0.0
      %1071 = vmatpush2.msra.mxu0 0.0
      %1072 = vmatprep.subr.mxu0 0.0
      %1073 = vmatpush2.msra.mxu0 0.0
      %1074 = vmatprep.subr.mxu0 0.0
      %1075 = vmatpush2.msra.mxu0 0.0
      %1076 = vmatprep.subr.mxu0 0.0
      %1077 = vmatpush2.msra.mxu0 0.0
      %1078 = vmatprep.subr.mxu0 0.0
      %1079 = vmatpush2.msra.mxu0 0.0
      %1080 = vmatprep.subr.mxu0 0.0
      %1081 = vmatpush2.msra.mxu0 0.0
      %1082 = vmatprep.subr.mxu0 0.0
      %1083 = vmatpush2.msra.mxu0 0.0
      %1084 = vmatprep.subr.mxu0 0.0
      %1085 = vmatpush2.msra.mxu0 0.0
      %1086 = vmatprep.subr.mxu0 0.0
      %1087 = vmatpush2.msra.mxu0 0.0
      %1088 = vmatprep.subr.mxu0 0.0
      %1089 = vmatpush2.msra.mxu0 0.0
      %1090 = vmatprep.subr.mxu0 0.0
      %1091 = vmatpush2.msra.mxu0 0.0
      %1092 = vmatprep.subr.mxu0 0.0
      %1093 = vmatpush2.msra.mxu0 0.0
      %1094 = vmatprep.subr.mxu0 0.0
      %1095 = vmatpush2.msra.mxu0 0.0
      %1096 = vmatprep.subr.mxu0 0.0
      %1097 = vmatpush2.msra.mxu0 0.0
      %1098 = vmatprep.subr.mxu0 0.0
      %1099 = vmatpush2.msra.mxu0 0.0
      %1100 = vmatprep.mubr.f32.mxu0 0.0
      %1101 = vmatmul.mubr.f32.gmra.mxu0 %v985
      %v1102 = vpop.f32.mrf.mxu0
      %v1103 = vadd.f32 %v982, %v1102
      %v1104 = vpop.f32.mrf.mxu0
      %1105 = vmatprep.mubr.f32.mxu0 0.0
      %1106 = vmatmul.mubr.f32.gmra.mxu0 %v988
      %v1107 = vpop.f32.mrf.mxu0
      %v1108 = vadd.f32 %v982, %v1107
      %v1109 = vpop.f32.mrf.mxu0
      %1110 = vmatprep.mubr.f32.mxu0 0.0
      %1111 = vmatmul.mubr.f32.gmra.mxu0 %v991
      %v1112 = vpop.f32.mrf.mxu0
      %v1113 = vadd.f32 %v982, %v1112
      %v1114 = vpop.f32.mrf.mxu0
      %1115 = vmatprep.mubr.f32.mxu0 0.0
      %1116 = vmatmul.mubr.f32.gmra.mxu0 %v994
      %v1117 = vpop.f32.mrf.mxu0
      %v1118 = vadd.f32 %v982, %v1117
      %v1119 = vpop.f32.mrf.mxu0
      %1120 = vmatprep.mubr.f32.mxu0 0.0
      %1121 = vmatmul.mubr.f32.gmra.mxu0 %v997
      %v1122 = vpop.f32.mrf.mxu0
      %v1123 = vadd.f32 %v982, %v1122
      %v1124 = vpop.f32.mrf.mxu0
      %1125 = vmatprep.mubr.f32.mxu0 0.0
      %1126 = vmatmul.mubr.f32.gmra.mxu0 %v1000
      %v1127 = vpop.f32.mrf.mxu0
      %v1128 = vadd.f32 %v982, %v1127
      %v1129 = vpop.f32.mrf.mxu0
      %1130 = vmatprep.mubr.f32.mxu0 0.0
      %1131 = vmatmul.mubr.f32.gmra.mxu0 %v1003
      %v1132 = vpop.f32.mrf.mxu0
      %v1133 = vadd.f32 %v982, %v1132
      %v1134 = vpop.f32.mrf.mxu0
      %1135 = vmatprep.mubr.f32.mxu0 0.0
      %1136 = vmatmul.mubr.f32.gmra.mxu0 %v1006
      %v1137 = vpop.f32.mrf.mxu0
      %v1138 = vadd.f32 %v982, %v1137
      %v1139 = vpop.f32.mrf.mxu0
      %1140 = vmatprep.mubr.f32.mxu0 0.0
      %1141 = vmatmul.mubr.f32.gmra.mxu0 %v1009
      %v1142 = vpop.f32.mrf.mxu0
      %v1143 = vadd.f32 %v982, %v1142
      %v1144 = vpop.f32.mrf.mxu0
      %1145 = vmatprep.mubr.f32.mxu0 0.0
      %1146 = vmatmul.mubr.f32.gmra.mxu0 %v1012
      %v1147 = vpop.f32.mrf.mxu0
      %v1148 = vadd.f32 %v982, %v1147
      %v1149 = vpop.f32.mrf.mxu0
      %1150 = vmatprep.mubr.f32.mxu0 0.0
      %1151 = vmatmul.mubr.f32.gmra.mxu0 %v1015
      %v1152 = vpop.f32.mrf.mxu0
      %v1153 = vadd.f32 %v982, %v1152
      %v1154 = vpop.f32.mrf.mxu0
      %1155 = vmatprep.mubr.f32.mxu0 0.0
      %1156 = vmatmul.mubr.f32.gmra.mxu0 %v1018
      %v1157 = vpop.f32.mrf.mxu0
      %v1158 = vadd.f32 %v982, %v1157
      %v1159 = vpop.f32.mrf.mxu0
      %1160 = vmatprep.mubr.f32.mxu0 0.0
      %1161 = vmatmul.mubr.f32.gmra.mxu0 %v1021
      %v1162 = vpop.f32.mrf.mxu0
      %v1163 = vadd.f32 %v982, %v1162
      %v1164 = vpop.f32.mrf.mxu0
      %1165 = vmatprep.mubr.f32.mxu0 0.0
      %1166 = vmatmul.mubr.f32.gmra.mxu0 %v1024
      %v1167 = vpop.f32.mrf.mxu0
      %v1168 = vadd.f32 %v982, %v1167
      %v1169 = vpop.f32.mrf.mxu0
      %1170 = vmatprep.mubr.f32.mxu0 0.0
      %1171 = vmatmul.mubr.f32.gmra.mxu0 %v1027
      %v1172 = vpop.f32.mrf.mxu0
      %v1173 = vadd.f32 %v982, %v1172
      %v1174 = vpop.f32.mrf.mxu0
      %1175 = vmatprep.mubr.f32.mxu0 0.0
      %1176 = vmatmul.mubr.f32.gmra.mxu0 %v1030
      %v1177 = vpop.f32.mrf.mxu0
      %v1178 = vadd.f32 %v982, %v1177
      %v1179 = vpop.f32.mrf.mxu0
      %1180 = vdwg.mxu0
      %vm1181 = vcmask 64512
      %1182 = vst.msk [vmem:[%s418] sm:$0xff] %vm1181, %v1103
      %1183 = vst.msk [vmem:[%s418 + $0x8] sm:$0xff] %vm1181, %v1108
      %1184 = vst.msk [vmem:[%s418 + $0x10] sm:$0xff] %vm1181, %v1113
      %1185 = vst.msk [vmem:[%s418 + $0x18] sm:$0xff] %vm1181, %v1118
      %1186 = vst.msk [vmem:[%s418 + $0x20] sm:$0xff] %vm1181, %v1123
      %1187 = vst.msk [vmem:[%s418 + $0x28] sm:$0xff] %vm1181, %v1128
      %1188 = vst.msk [vmem:[%s418 + $0x30] sm:$0xff] %vm1181, %v1133
      %1189 = vst.msk [vmem:[%s418 + $0x38] sm:$0xff] %vm1181, %v1138
      %1190 = vst.msk [vmem:[%s418 + $0x40] sm:$0xff] %vm1181, %v1143
      %1191 = vst.msk [vmem:[%s418 + $0x48] sm:$0xff] %vm1181, %v1148
      %1192 = vst.msk [vmem:[%s418 + $0x50] sm:$0xff] %vm1181, %v1153
      %1193 = vst.msk [vmem:[%s418 + $0x58] sm:$0xff] %vm1181, %v1158
      %1194 = vst.msk [vmem:[%s418 + $0x60] sm:$0xff] %vm1181, %v1163
      %1195 = vst.msk [vmem:[%s418 + $0x68] sm:$0xff] %vm1181, %v1168
      %1196 = vst.msk [vmem:[%s418 + $0x70] sm:$0xff] %vm1181, %v1173
      %1197 = vst.msk [vmem:[%s418 + $0x78] sm:$0xff] %vm1181, %v1178
      %s1198 = smul.u32 8, %s22
      %p1199 = scmp.lt.s32.totalorder %s21, 1
      %s1200 = scalar_select %p1199, %s21, 1
      %p1201 = scmp.lt.s32.totalorder %s1198, 15
      %s1202 = scalar_select %p1201, %s1198, 15
      %s1203 = smul.addr %s1202, 2
      %s1204 = smul.addr %s1200, 32
      %s1205 = sadd.s32 %s1203, %s1204
      %s1206 = smul.addr %s1205, 8
      %s1207 = scalar_lea.vmem %s6, %s1206
      // Predicated region
      $region53: #{tpu_custom_call.1} parent=43 // pred_check
        %p1208 = pneg %p212
      $region54: #{tpu_custom_call.1} parent=43 // pred_check_branch
        %1210 = sbr.rel (%p1208) target = $region56
      $region55: #{tpu_custom_call.1} parent=43 // pred_region
        %s1211 = smul.u32 8, %s22
      $region56: #{tpu_custom_call.1} parent=43 // pred_fallthru
        _
    $region44: #{tpu_custom_call.1} parent=5 // pred_fallthru
      _
    %p1212 = scmp.le.s32.totalorder 2, %s12
    // Predicated region
    $region57: #{tpu_custom_call.1} parent=5 // pred_check
      %p1213 = pneg %p1212
    $region58: #{tpu_custom_call.1} parent=5 // pred_check_branch
      %1215 = sbr.rel (%p1213) target = $region60
    $region59: #{tpu_custom_call.1} parent=5 // pred_region
      %s1216 = ssub.s32 %s12, 2
      // Predicated region
      $region61: #{tpu_custom_call.1} parent=59 // pred_check
        %p1217 = pneg %p218
      $region62: #{tpu_custom_call.1} parent=59 // pred_check_branch
        %1219 = sbr.rel (%p1217) target = $region64
      $region63: #{tpu_custom_call.1} parent=59 // pred_region
        %s1220 = smul.u32 8, %s24
        %p1221 = scmp.lt.s32.totalorder %s23, 1
        %s1222 = scalar_select %p1221, %s23, 1
        %p1223 = scmp.lt.s32.totalorder %s1220, 15
        %s1224 = scalar_select %p1223, %s1220, 15
        %s1225 = smul.addr %s1224, 2
        %s1226 = smul.addr %s1222, 32
        %s1227 = sadd.s32 %s1225, %s1226
        %s1228 = smul.addr %s1227, 8
        %s1229 = scalar_lea.vmem %s6, %s1228
      $region64: #{tpu_custom_call.1} parent=59 // pred_fallthru
        _
    $region60: #{tpu_custom_call.1} parent=5 // pred_fallthru
      _
  $region6: #{tpu_custom_call.1} parent=0 // loop_footer
    %s16 = sadd.s32 1, %s12
  $region7: #{tpu_custom_call.1} parent=0 // loop_footer_branch
    %11 = sbr.rel target = $region3
  $region8: #{tpu_custom_call.1} parent=0 // loop_exit
    _

</llo_original>
